<compile_context>
chip_gen: v5e
topology: v5e:2x2
jax: 0.10.0
libtpu: 0.0.40
codegen_flags: <defaults>
</compile_context>

<pallas_src>
import math
import jax
import jax.numpy as jnp
from jax.experimental import pallas as pl
from jax.experimental.pallas import tpu as pltpu

# ---- small synthetic BERT config (weights initialized in-script, not loaded) ----
VOCAB = 128
TYPE_VOCAB = 2
MAX_POS = 32
HIDDEN = 32
N_HEADS = 4
HEAD_DIM = HIDDEN // N_HEADS
INTER = 64
N_LAYERS = 2
N_CLASSES = 7
LN_EPS = 1e-12
BATCH = 2
SEQ = 8
ROWS = BATCH * SEQ

SCALE = 1.0 / math.sqrt(HEAD_DIM)


def _bf16(x):
    return x.astype(jnp.bfloat16)


def _layernorm(x, g, b):
    # f32 statistics (keep off the bf16 path — v5e has no bf16 VPU/EUP)
    mean = jnp.mean(x, axis=-1, keepdims=True)
    var = jnp.mean(jnp.square(x - mean), axis=-1, keepdims=True)
    return (x - mean) * jax.lax.rsqrt(var + LN_EPS) * g + b


def _gelu(x):
    # TODO(synk): HF BertIntermediate default is exact erf-GELU; tanh approx differs ~1e-3.
    return 0.5 * x * (1.0 + jnp.tanh(0.7978845608028654 * (x + 0.044715 * x * x * x)))


# ----------------------------- single fused kernel -----------------------------

def _bert_kernel(ids_ref, mask_ref,
                 wemb_ref, pemb_ref, temb_ref, eg_ref, eb_ref,
                 qkv_w_ref, qkv_b_ref, ao_w_ref, ao_b_ref, aln_g_ref, aln_b_ref,
                 fi_w_ref, fi_b_ref, fo_w_ref, fo_b_ref, fln_g_ref, fln_b_ref,
                 pw_ref, pb_ref, cw_ref, cb_ref,
                 logits_ref, act_ref):
    layer = pl.program_id(0)

    # ---- embeddings + embedding LN (once, at layer 0); act_ref then carries the
    #      activation resident in VMEM across the (arbitrary) layer axis ----
    @pl.when(layer == 0)
    def _():
        # word lookup as a lane-dense one-hot bf16 matmul (VOCAB == 128 lanes)
        onehot = jnp.where(
            ids_ref[...] == jax.lax.broadcasted_iota(jnp.int32, (ROWS, VOCAB), 1),
            1.0, 0.0).astype(jnp.bfloat16)
        word = jnp.dot(onehot, wemb_ref[...], preferred_element_type=jnp.float32)
        pos = jnp.concatenate([pemb_ref[0:SEQ, :]] * BATCH, axis=0)   # rows 0..S-1, tiled per sample
        typ = temb_ref[0:1, :]                                        # token_type_ids == 0
        act_ref[...] = _layernorm(word + pos + typ, eg_ref[...], eb_ref[...])

    x = act_ref[...]                                                  # [R, H] f32
    mask = mask_ref[...]                                              # [R, R] block-diag additive mask

    # ---- fused QKV projection over all rows: one [H, 3H] matmul ----
    qkv = jnp.dot(_bf16(x), qkv_w_ref[...],
                  preferred_element_type=jnp.float32) + qkv_b_ref[...]        # [R, 3H] f32

    # ---- per-head attention on the full (R, R) score matrix; block-diagonal mask
    #      keeps samples separated and applies the HF padding mask ----
    ctx_heads = []
    for h in range(N_HEADS):
        lo = h * HEAD_DIM
        qh = _bf16(qkv[:, lo:lo + HEAD_DIM])
        kh = _bf16(qkv[:, HIDDEN + lo:HIDDEN + lo + HEAD_DIM])
        vh = _bf16(qkv[:, 2 * HIDDEN + lo:2 * HIDDEN + lo + HEAD_DIM])

        s = jax.lax.dot_general(qh, kh, (((1,), (1,)), ((), ())),
                                preferred_element_type=jnp.float32)           # q @ k^T  [R, R]
        s = s * SCALE + mask
        # Deliberate numeric trade: no max-subtraction.  Unmasked scores are tiny and
        # masked logits of -1e4 underflow to exactly 0 under f32 exp.
        p = jnp.exp(s)
        p = p * pl.reciprocal(jnp.sum(p, axis=-1, keepdims=True), approx=True)
        ctx_heads.append(jnp.dot(_bf16(p), vh, preferred_element_type=jnp.float32))

    # head merge: single [R,H] @ [H,H] output projection (bf16 weight)
    ctx = _bf16(jnp.concatenate(ctx_heads, axis=1))                           # [R, H]
    attn = jnp.dot(ctx, ao_w_ref[...],
                   preferred_element_type=jnp.float32) + ao_b_ref[...]
    x = _layernorm(attn + x, aln_g_ref[...], aln_b_ref[...])

    # ---- FFN: intermediate + GELU, output, residual + LN ----
    hmid = _gelu(jnp.dot(_bf16(x), fi_w_ref[...],
                         preferred_element_type=jnp.float32) + fi_b_ref[...])  # [R, INTER]
    ffn = jnp.dot(_bf16(hmid), fo_w_ref[...],
                  preferred_element_type=jnp.float32) + fo_b_ref[...]          # [R, H]
    x = _layernorm(ffn + x, fln_g_ref[...], fln_b_ref[...])
    act_ref[...] = x

    # ---- fused pooler + classifier at the last layer ----
    @pl.when(layer == N_LAYERS - 1)
    def _():
        cls = jnp.concatenate([x[b * SEQ:b * SEQ + 1, :] for b in range(BATCH)], axis=0)  # [B, H]
        pooled = jnp.tanh(jnp.dot(_bf16(cls), pw_ref[...],
                                  preferred_element_type=jnp.float32) + pb_ref[...])
        logits_ref[...] = (jnp.dot(_bf16(pooled), cw_ref[...],
                                   preferred_element_type=jnp.float32) + cb_ref[...])


def _const(shape):
    # full-array block, constant across the layer grid axis (no re-DMA between steps)
    return pl.BlockSpec(shape, lambda l: (0,) * len(shape))


def bert_model(ids2d, add_mask, params):
    lp = params["layer_params"]
    in_specs = [
        _const((ROWS, 1)),                                             # input ids (int32)
        _const((ROWS, ROWS)),                                          # block-diag additive mask
        _const((VOCAB, HIDDEN)),                                       # word emb (bf16)
        _const((MAX_POS, HIDDEN)),                                     # position emb
        _const((TYPE_VOCAB, HIDDEN)),                                  # token-type emb
        _const((1, HIDDEN)), _const((1, HIDDEN)),                      # emb LN gamma / beta
        pl.BlockSpec((None, HIDDEN, 3 * HIDDEN), lambda l: (l, 0, 0)),  # qkv_w (bf16)
        pl.BlockSpec((None, 1, 3 * HIDDEN), lambda l: (l, 0, 0)),       # qkv_b
        pl.BlockSpec((None, HIDDEN, HIDDEN), lambda l: (l, 0, 0)),      # attn out W (bf16)
        pl.BlockSpec((None, 1, HIDDEN), lambda l: (l, 0, 0)),           # attn out b
        pl.BlockSpec((None, 1, HIDDEN), lambda l: (l, 0, 0)),           # attn LN gamma
        pl.BlockSpec((None, 1, HIDDEN), lambda l: (l, 0, 0)),           # attn LN beta
        pl.BlockSpec((None, HIDDEN, INTER), lambda l: (l, 0, 0)),       # ffn in W (bf16)
        pl.BlockSpec((None, 1, INTER), lambda l: (l, 0, 0)),            # ffn in b
        pl.BlockSpec((None, INTER, HIDDEN), lambda l: (l, 0, 0)),       # ffn out W (bf16)
        pl.BlockSpec((None, 1, HIDDEN), lambda l: (l, 0, 0)),           # ffn out b
        pl.BlockSpec((None, 1, HIDDEN), lambda l: (l, 0, 0)),           # ffn LN gamma
        pl.BlockSpec((None, 1, HIDDEN), lambda l: (l, 0, 0)),           # ffn LN beta
        _const((HIDDEN, HIDDEN)),                                       # pooler W (bf16)
        _const((1, HIDDEN)),                                            # pooler b
        _const((HIDDEN, N_CLASSES)),                                    # classifier W (bf16)
        _const((1, N_CLASSES)),                                         # classifier b
    ]
    return pl.pallas_call(
        _bert_kernel,
        grid=(N_LAYERS,),
        in_specs=in_specs,
        out_specs=_const((BATCH, N_CLASSES)),
        out_shape=jax.ShapeDtypeStruct((BATCH, N_CLASSES), jnp.float32),
        scratch_shapes=[pltpu.VMEM((ROWS, HIDDEN), jnp.float32)],       # layer-resident activation
        compiler_params=pltpu.CompilerParams(
            dimension_semantics=("arbitrary",)),
    )(ids2d, add_mask,
      params["word_emb"], params["pos_emb"], params["type_emb"],
      params["emb_g"], params["emb_b"], *lp,
      params["pool_w"], params["pool_b"], params["cls_w"], params["cls_b"])


# ----------------------------- parameters -----------------------------

def init_params(key):
    keys = iter(jax.random.split(key, 64))

    def w(shape):
        return 0.02 * jax.random.normal(next(keys), shape, jnp.float32)

    qkv_w, qkv_b = [], []
    ao_w, ao_b, aln_g, aln_b = [], [], [], []
    fi_w, fi_b, fo_w, fo_b, fln_g, fln_b = [], [], [], [], [], []
    for _ in range(N_LAYERS):
        wq, wk, wv = w((HIDDEN, HIDDEN)), w((HIDDEN, HIDDEN)), w((HIDDEN, HIDDEN))
        qkv_w.append(jnp.concatenate([wq, wk, wv], axis=1))        # fused QKV weight
        qkv_b.append(jnp.zeros((1, 3 * HIDDEN), jnp.float32))
        ao_w.append(w((HIDDEN, HIDDEN)))
        ao_b.append(jnp.zeros((1, HIDDEN), jnp.float32))
        aln_g.append(jnp.ones((1, HIDDEN), jnp.float32))
        aln_b.append(jnp.zeros((1, HIDDEN), jnp.float32))
        fi_w.append(w((HIDDEN, INTER)))
        fi_b.append(jnp.zeros((1, INTER), jnp.float32))
        fo_w.append(w((INTER, HIDDEN)))
        fo_b.append(jnp.zeros((1, HIDDEN), jnp.float32))
        fln_g.append(jnp.ones((1, HIDDEN), jnp.float32))
        fln_b.append(jnp.zeros((1, HIDDEN), jnp.float32))

    def stack(xs, dtype=jnp.float32):
        return jnp.stack(xs).astype(dtype)

    layer_params = (
        stack(qkv_w, jnp.bfloat16), stack(qkv_b),
        stack(ao_w, jnp.bfloat16), stack(ao_b), stack(aln_g), stack(aln_b),
        stack(fi_w, jnp.bfloat16), stack(fi_b),
        stack(fo_w, jnp.bfloat16), stack(fo_b), stack(fln_g), stack(fln_b),
    )
    return {
        # word table kept in bf16 (consistent with the bf16 MXU path; one-hot matmul gather)
        "word_emb": w((VOCAB, HIDDEN)).astype(jnp.bfloat16),
        "pos_emb": w((MAX_POS, HIDDEN)),
        "type_emb": w((TYPE_VOCAB, HIDDEN)),
        "emb_g": jnp.ones((1, HIDDEN), jnp.float32),
        "emb_b": jnp.zeros((1, HIDDEN), jnp.float32),
        "layer_params": layer_params,
        "pool_w": w((HIDDEN, HIDDEN)).astype(jnp.bfloat16),
        "pool_b": jnp.zeros((1, HIDDEN), jnp.float32),
        "cls_w": w((HIDDEN, N_CLASSES)).astype(jnp.bfloat16),
        "cls_b": jnp.zeros((1, N_CLASSES), jnp.float32),
    }


# ----------------------------- forward pass -----------------------------

def custom_bert_forward(params, input_ids, attention_mask):
    B, S = input_ids.shape
    ids2d = input_ids.reshape(B * S, 1).astype(jnp.int32)

    # Block-diagonal HF-style additive mask over the flattened (B*S, B*S) score matrix:
    # 0 where (same sample AND key unmasked), -10000 otherwise.
    row_batch = jnp.arange(B * S, dtype=jnp.int32) // S
    same = row_batch[:, None] == row_batch[None, :]
    key_ok = attention_mask.reshape(1, B * S) > 0
    add_mask = jnp.where(same & key_ok, 0.0, -10000.0).astype(jnp.float32)

    # TODO(synk): dropout omitted (eval-mode forward); token_type_ids = 0 as in default BERT call.
    return bert_model(ids2d, add_mask, params)


if __name__ == "__main__":
    key = jax.random.PRNGKey(0)
    pkey, ikey = jax.random.split(key)
    params = init_params(pkey)

    input_ids = jax.random.randint(ikey, (BATCH, SEQ), 0, VOCAB, dtype=jnp.int32)
    attention_mask = jnp.ones((BATCH, SEQ), dtype=jnp.int32)
    attention_mask = attention_mask.at[1, -2:].set(0)   # non-trivial padding mask

    logits = jax.jit(custom_bert_forward)(params, input_ids, attention_mask)
    jax.block_until_ready(logits)
    assert logits.shape == (BATCH, N_CLASSES) and logits.dtype == jnp.float32
    print("KERNEL_OK")
</pallas_src>

<mosaic_0001>
module attributes {stable_mosaic.version = 11 : i64} {
  func.func @_bert_kernel(%arg0: i32, %arg1: memref<16x1xi32, #tpu.memory_space<vmem>>, %arg2: memref<16x16xf32, #tpu.memory_space<vmem>>, %arg3: memref<128x32xbf16, #tpu.memory_space<vmem>>, %arg4: memref<32x32xf32, #tpu.memory_space<vmem>>, %arg5: memref<2x32xf32, #tpu.memory_space<vmem>>, %arg6: memref<1x32xf32, #tpu.memory_space<vmem>>, %arg7: memref<1x32xf32, #tpu.memory_space<vmem>>, %arg8: memref<1x32x96xbf16, #tpu.memory_space<vmem>>, %arg9: memref<1x1x96xf32, #tpu.memory_space<vmem>>, %arg10: memref<1x32x32xbf16, #tpu.memory_space<vmem>>, %arg11: memref<1x1x32xf32, #tpu.memory_space<vmem>>, %arg12: memref<1x1x32xf32, #tpu.memory_space<vmem>>, %arg13: memref<1x1x32xf32, #tpu.memory_space<vmem>>, %arg14: memref<1x32x64xbf16, #tpu.memory_space<vmem>>, %arg15: memref<1x1x64xf32, #tpu.memory_space<vmem>>, %arg16: memref<1x64x32xbf16, #tpu.memory_space<vmem>>, %arg17: memref<1x1x32xf32, #tpu.memory_space<vmem>>, %arg18: memref<1x1x32xf32, #tpu.memory_space<vmem>>, %arg19: memref<1x1x32xf32, #tpu.memory_space<vmem>>, %arg20: memref<32x32xbf16, #tpu.memory_space<vmem>>, %arg21: memref<1x32xf32, #tpu.memory_space<vmem>>, %arg22: memref<32x7xbf16, #tpu.memory_space<vmem>>, %arg23: memref<1x7xf32, #tpu.memory_space<vmem>>, %arg24: memref<2x7xf32, #tpu.memory_space<vmem>>, %arg25: memref<16x32xf32, #tpu.memory_space<vmem>>) attributes {dimension_semantics = [#tpu.dimension_semantics<arbitrary>], iteration_bounds = array<i64: 2>, scalar_prefetch = 0 : i64, scratch_operands = 1 : i64, tpu.core_type = #tpu.core_type<tc>, window_params = [{pipeline_mode = #tpu.pipeline_mode<synchronous>, transform_indices = @transform_0, window_bounds = array<i64: 16, 1>}, {pipeline_mode = #tpu.pipeline_mode<synchronous>, transform_indices = @transform_1, window_bounds = array<i64: 16, 16>}, {pipeline_mode = #tpu.pipeline_mode<synchronous>, transform_indices = @transform_2, window_bounds = array<i64: 128, 32>}, {pipeline_mode = #tpu.pipeline_mode<synchronous>, transform_indices = @transform_3, window_bounds = array<i64: 32, 32>}, {pipeline_mode = #tpu.pipeline_mode<synchronous>, transform_indices = @transform_4, window_bounds = array<i64: 2, 32>}, {pipeline_mode = #tpu.pipeline_mode<synchronous>, transform_indices = @transform_5, window_bounds = array<i64: 1, 32>}, {pipeline_mode = #tpu.pipeline_mode<synchronous>, transform_indices = @transform_6, window_bounds = array<i64: 1, 32>}, {transform_indices = @transform_7, window_bounds = array<i64: 1, 32, 96>}, {transform_indices = @transform_8, window_bounds = array<i64: 1, 1, 96>}, {transform_indices = @transform_9, window_bounds = array<i64: 1, 32, 32>}, {transform_indices = @transform_10, window_bounds = array<i64: 1, 1, 32>}, {transform_indices = @transform_11, window_bounds = array<i64: 1, 1, 32>}, {transform_indices = @transform_12, window_bounds = array<i64: 1, 1, 32>}, {transform_indices = @transform_13, window_bounds = array<i64: 1, 32, 64>}, {transform_indices = @transform_14, window_bounds = array<i64: 1, 1, 64>}, {transform_indices = @transform_15, window_bounds = array<i64: 1, 64, 32>}, {transform_indices = @transform_16, window_bounds = array<i64: 1, 1, 32>}, {transform_indices = @transform_17, window_bounds = array<i64: 1, 1, 32>}, {transform_indices = @transform_18, window_bounds = array<i64: 1, 1, 32>}, {pipeline_mode = #tpu.pipeline_mode<synchronous>, transform_indices = @transform_19, window_bounds = array<i64: 32, 32>}, {pipeline_mode = #tpu.pipeline_mode<synchronous>, transform_indices = @transform_20, window_bounds = array<i64: 1, 32>}, {pipeline_mode = #tpu.pipeline_mode<synchronous>, transform_indices = @transform_21, window_bounds = array<i64: 32, 7>}, {pipeline_mode = #tpu.pipeline_mode<synchronous>, transform_indices = @transform_22, window_bounds = array<i64: 1, 7>}, {pipeline_mode = #tpu.pipeline_mode<synchronous>, transform_indices = @transform_23, window_bounds = array<i64: 2, 7>}]} {
    %c0_i32 = arith.constant 0 : i32
    %0 = arith.cmpi eq, %arg0, %c0_i32 : i32
    %1 = arith.extui %0 : i1 to i32
    %c0_i32_0 = arith.constant 0 : i32
    %2 = arith.cmpi ne, %1, %c0_i32_0 : i32
    scf.if %2 {
      %c0_76 = arith.constant 0 : index
      %c0_77 = arith.constant 0 : index
      %181 = vector.load %arg1[%c0_76, %c0_77] : memref<16x1xi32, #tpu.memory_space<vmem>>, vector<16x1xi32>
      %182 = tpu.iota {dimensions = array<i32: 1>} : vector<16x128xi32>
      %183 = vector.broadcast %181 : vector<16x1xi32> to vector<16x128xi32>
      %184 = arith.cmpi eq, %183, %182 : vector<16x128xi32>
      %cst_78 = arith.constant 1.000000e+00 : f32
      %cst_79 = arith.constant 0.000000e+00 : f32
      %185 = vector.broadcast %cst_78 : f32 to vector<16x128xf32>
      %186 = vector.broadcast %cst_79 : f32 to vector<16x128xf32>
      %187 = arith.select %184, %185, %186 : vector<16x128xi1>, vector<16x128xf32>
      %188 = arith.truncf %187 : vector<16x128xf32> to vector<16x128xbf16>
      %c0_80 = arith.constant 0 : index
      %c0_81 = arith.constant 0 : index
      %189 = vector.load %arg3[%c0_80, %c0_81] : memref<128x32xbf16, #tpu.memory_space<vmem>>, vector<128x32xbf16>
      %cst_82 = arith.constant dense<0.000000e+00> : vector<16x32xf32>
      %190 = tpu.matmul %188, %189, %cst_82 {dimension_numbers = #tpu.dot_dimension_numbers<[1], [0], [0], [1], [0, 0, 1, 1], [], []>} : vector<16x128xbf16>, vector<128x32xbf16>, vector<16x32xf32> -> vector<16x32xf32>
      %c0_83 = arith.constant 0 : index
      %c0_84 = arith.constant 0 : index
      %191 = vector.load %arg4[%c0_83, %c0_84] : memref<32x32xf32, #tpu.memory_space<vmem>>, vector<8x32xf32>
      %192 = tpu.concatenate %191, %191 in 0 : vector<8x32xf32>, vector<8x32xf32> -> vector<16x32xf32>
      %c0_85 = arith.constant 0 : index
      %c0_86 = arith.constant 0 : index
      %193 = vector.load %arg5[%c0_85, %c0_86] : memref<2x32xf32, #tpu.memory_space<vmem>>, vector<1x32xf32>
      %194 = arith.addf %190, %192 : vector<16x32xf32>
      %195 = vector.broadcast %193 : vector<1x32xf32> to vector<16x32xf32>
      %196 = arith.addf %194, %195 : vector<16x32xf32>
      %c0_87 = arith.constant 0 : index
      %c0_88 = arith.constant 0 : index
      %197 = vector.load %arg6[%c0_87, %c0_88] : memref<1x32xf32, #tpu.memory_space<vmem>>, vector<1x32xf32>
      %c0_89 = arith.constant 0 : index
      %c0_90 = arith.constant 0 : index
      %198 = vector.load %arg7[%c0_89, %c0_90] : memref<1x32xf32, #tpu.memory_space<vmem>>, vector<1x32xf32>
      %cst_91 = arith.constant dense<0.000000e+00> : vector<16xf32>
      %199 = vector.multi_reduction <add>, %196, %cst_91 [1] : vector<16x32xf32> to vector<16xf32>
      %200 = vector.shape_cast %199 : vector<16xf32> to vector<16x1xf32>
      %cst_92 = arith.constant 3.200000e+01 : f32
      %201 = vector.broadcast %cst_92 : f32 to vector<16x1xf32>
      %202 = arith.divf %200, %201 : vector<16x1xf32>
      %203 = vector.broadcast %202 : vector<16x1xf32> to vector<16x32xf32>
      %204 = arith.subf %196, %203 : vector<16x32xf32>
      %205 = arith.mulf %204, %204 : vector<16x32xf32>
      %cst_93 = arith.constant dense<0.000000e+00> : vector<16xf32>
      %206 = vector.multi_reduction <add>, %205, %cst_93 [1] : vector<16x32xf32> to vector<16xf32>
      %207 = vector.shape_cast %206 : vector<16xf32> to vector<16x1xf32>
      %cst_94 = arith.constant 3.200000e+01 : f32
      %208 = vector.broadcast %cst_94 : f32 to vector<16x1xf32>
      %209 = arith.divf %207, %208 : vector<16x1xf32>
      %210 = vector.broadcast %202 : vector<16x1xf32> to vector<16x32xf32>
      %211 = arith.subf %196, %210 : vector<16x32xf32>
      %cst_95 = arith.constant 9.99999996E-13 : f32
      %212 = vector.broadcast %cst_95 : f32 to vector<16x1xf32>
      %213 = arith.addf %209, %212 : vector<16x1xf32>
      %214 = math.rsqrt %213 : vector<16x1xf32>
      %215 = vector.broadcast %214 : vector<16x1xf32> to vector<16x32xf32>
      %216 = arith.mulf %211, %215 : vector<16x32xf32>
      %217 = vector.broadcast %197 : vector<1x32xf32> to vector<16x32xf32>
      %218 = arith.mulf %216, %217 : vector<16x32xf32>
      %219 = vector.broadcast %198 : vector<1x32xf32> to vector<16x32xf32>
      %220 = arith.addf %218, %219 : vector<16x32xf32>
      %c0_96 = arith.constant 0 : index
      %c0_97 = arith.constant 0 : index
      %221 = vector.load %arg25[%c0_96, %c0_97] : memref<16x32xf32, #tpu.memory_space<vmem>>, vector<16x32xf32>
      tpu.vector_store %arg25[%c0_96, %c0_97], %220 {strides = array<i32>} : memref<16x32xf32, #tpu.memory_space<vmem>>, vector<16x32xf32>,
    } else {
    }
    %c0 = arith.constant 0 : index
    %c0_1 = arith.constant 0 : index
    %3 = vector.load %arg25[%c0, %c0_1] : memref<16x32xf32, #tpu.memory_space<vmem>>, vector<16x32xf32>
    %c0_2 = arith.constant 0 : index
    %c0_3 = arith.constant 0 : index
    %4 = vector.load %arg2[%c0_2, %c0_3] : memref<16x16xf32, #tpu.memory_space<vmem>>, vector<16x16xf32>
    %5 = arith.truncf %3 : vector<16x32xf32> to vector<16x32xbf16>
    %c0_4 = arith.constant 0 : index
    %c0_5 = arith.constant 0 : index
    %c0_6 = arith.constant 0 : index
    %6 = vector.load %arg8[%c0_4, %c0_5, %c0_6] : memref<1x32x96xbf16, #tpu.memory_space<vmem>>, vector<1x32x96xbf16>
    %7 = vector.shape_cast %6 : vector<1x32x96xbf16> to vector<32x96xbf16>
    %cst = arith.constant dense<0.000000e+00> : vector<16x96xf32>
    %8 = tpu.matmul %5, %7, %cst {dimension_numbers = #tpu.dot_dimension_numbers<[1], [0], [0], [1], [0, 0, 1, 1], [], []>} : vector<16x32xbf16>, vector<32x96xbf16>, vector<16x96xf32> -> vector<16x96xf32>
    %c0_7 = arith.constant 0 : index
    %c0_8 = arith.constant 0 : index
    %c0_9 = arith.constant 0 : index
    %9 = vector.load %arg9[%c0_7, %c0_8, %c0_9] : memref<1x1x96xf32, #tpu.memory_space<vmem>>, vector<1x1x96xf32>
    %10 = vector.shape_cast %9 : vector<1x1x96xf32> to vector<1x96xf32>
    %11 = vector.broadcast %10 : vector<1x96xf32> to vector<16x96xf32>
    %12 = arith.addf %8, %11 : vector<16x96xf32>
    %13 = vector.extract_strided_slice %12 {offsets = [0, 0], sizes = [16, 8], strides = [1, 1]} : vector<16x96xf32> to vector<16x8xf32>
    %14 = arith.truncf %13 : vector<16x8xf32> to vector<16x8xbf16>
    %15 = vector.extract_strided_slice %12 {offsets = [0, 32], sizes = [16, 8], strides = [1, 1]} : vector<16x96xf32> to vector<16x8xf32>
    %16 = arith.truncf %15 : vector<16x8xf32> to vector<16x8xbf16>
    %17 = vector.extract_strided_slice %12 {offsets = [0, 64], sizes = [16, 8], strides = [1, 1]} : vector<16x96xf32> to vector<16x8xf32>
    %18 = arith.truncf %17 : vector<16x8xf32> to vector<16x8xbf16>
    %cst_10 = arith.constant dense<0.000000e+00> : vector<16x16xf32>
    %19 = tpu.matmul %14, %16, %cst_10 {dimension_numbers = #tpu.dot_dimension_numbers<[1], [1], [0], [0], [0, 0, 1, 0], [], []>} : vector<16x8xbf16>, vector<16x8xbf16>, vector<16x16xf32> -> vector<16x16xf32>
    %cst_11 = arith.constant 0.353553385 : f32
    %20 = vector.broadcast %cst_11 : f32 to vector<16x16xf32>
    %21 = arith.mulf %19, %20 : vector<16x16xf32>
    %22 = arith.addf %21, %4 : vector<16x16xf32>
    %23 = math.exp %22 : vector<16x16xf32>
    %cst_12 = arith.constant dense<0.000000e+00> : vector<16xf32>
    %24 = vector.multi_reduction <add>, %23, %cst_12 [1] : vector<16x16xf32> to vector<16xf32>
    %25 = vector.shape_cast %24 : vector<16xf32> to vector<16x1xf32>
    %26 = tpu.reciprocal %25 {approx = true} : vector<16x1xf32> -> vector<16x1xf32>
    %27 = vector.broadcast %26 : vector<16x1xf32> to vector<16x16xf32>
    %28 = arith.mulf %23, %27 : vector<16x16xf32>
    %29 = arith.truncf %28 : vector<16x16xf32> to vector<16x16xbf16>
    %cst_13 = arith.constant dense<0.000000e+00> : vector<16x8xf32>
    %30 = tpu.matmul %29, %18, %cst_13 {dimension_numbers = #tpu.dot_dimension_numbers<[1], [0], [0], [1], [0, 0, 1, 1], [], []>} : vector<16x16xbf16>, vector<16x8xbf16>, vector<16x8xf32> -> vector<16x8xf32>
    %31 = vector.extract_strided_slice %12 {offsets = [0, 8], sizes = [16, 8], strides = [1, 1]} : vector<16x96xf32> to vector<16x8xf32>
    %32 = arith.truncf %31 : vector<16x8xf32> to vector<16x8xbf16>
    %33 = vector.extract_strided_slice %12 {offsets = [0, 40], sizes = [16, 8], strides = [1, 1]} : vector<16x96xf32> to vector<16x8xf32>
    %34 = arith.truncf %33 : vector<16x8xf32> to vector<16x8xbf16>
    %35 = vector.extract_strided_slice %12 {offsets = [0, 72], sizes = [16, 8], strides = [1, 1]} : vector<16x96xf32> to vector<16x8xf32>
    %36 = arith.truncf %35 : vector<16x8xf32> to vector<16x8xbf16>
    %cst_14 = arith.constant dense<0.000000e+00> : vector<16x16xf32>
    %37 = tpu.matmul %32, %34, %cst_14 {dimension_numbers = #tpu.dot_dimension_numbers<[1], [1], [0], [0], [0, 0, 1, 0], [], []>} : vector<16x8xbf16>, vector<16x8xbf16>, vector<16x16xf32> -> vector<16x16xf32>
    %cst_15 = arith.constant 0.353553385 : f32
    %38 = vector.broadcast %cst_15 : f32 to vector<16x16xf32>
    %39 = arith.mulf %37, %38 : vector<16x16xf32>
    %40 = arith.addf %39, %4 : vector<16x16xf32>
    %41 = math.exp %40 : vector<16x16xf32>
    %cst_16 = arith.constant dense<0.000000e+00> : vector<16xf32>
    %42 = vector.multi_reduction <add>, %41, %cst_16 [1] : vector<16x16xf32> to vector<16xf32>
    %43 = vector.shape_cast %42 : vector<16xf32> to vector<16x1xf32>
    %44 = tpu.reciprocal %43 {approx = true} : vector<16x1xf32> -> vector<16x1xf32>
    %45 = vector.broadcast %44 : vector<16x1xf32> to vector<16x16xf32>
    %46 = arith.mulf %41, %45 : vector<16x16xf32>
    %47 = arith.truncf %46 : vector<16x16xf32> to vector<16x16xbf16>
    %cst_17 = arith.constant dense<0.000000e+00> : vector<16x8xf32>
    %48 = tpu.matmul %47, %36, %cst_17 {dimension_numbers = #tpu.dot_dimension_numbers<[1], [0], [0], [1], [0, 0, 1, 1], [], []>} : vector<16x16xbf16>, vector<16x8xbf16>, vector<16x8xf32> -> vector<16x8xf32>
    %49 = vector.extract_strided_slice %12 {offsets = [0, 16], sizes = [16, 8], strides = [1, 1]} : vector<16x96xf32> to vector<16x8xf32>
    %50 = arith.truncf %49 : vector<16x8xf32> to vector<16x8xbf16>
    %51 = vector.extract_strided_slice %12 {offsets = [0, 48], sizes = [16, 8], strides = [1, 1]} : vector<16x96xf32> to vector<16x8xf32>
    %52 = arith.truncf %51 : vector<16x8xf32> to vector<16x8xbf16>
    %53 = vector.extract_strided_slice %12 {offsets = [0, 80], sizes = [16, 8], strides = [1, 1]} : vector<16x96xf32> to vector<16x8xf32>
    %54 = arith.truncf %53 : vector<16x8xf32> to vector<16x8xbf16>
    %cst_18 = arith.constant dense<0.000000e+00> : vector<16x16xf32>
    %55 = tpu.matmul %50, %52, %cst_18 {dimension_numbers = #tpu.dot_dimension_numbers<[1], [1], [0], [0], [0, 0, 1, 0], [], []>} : vector<16x8xbf16>, vector<16x8xbf16>, vector<16x16xf32> -> vector<16x16xf32>
    %cst_19 = arith.constant 0.353553385 : f32
    %56 = vector.broadcast %cst_19 : f32 to vector<16x16xf32>
    %57 = arith.mulf %55, %56 : vector<16x16xf32>
    %58 = arith.addf %57, %4 : vector<16x16xf32>
    %59 = math.exp %58 : vector<16x16xf32>
    %cst_20 = arith.constant dense<0.000000e+00> : vector<16xf32>
    %60 = vector.multi_reduction <add>, %59, %cst_20 [1] : vector<16x16xf32> to vector<16xf32>
    %61 = vector.shape_cast %60 : vector<16xf32> to vector<16x1xf32>
    %62 = tpu.reciprocal %61 {approx = true} : vector<16x1xf32> -> vector<16x1xf32>
    %63 = vector.broadcast %62 : vector<16x1xf32> to vector<16x16xf32>
    %64 = arith.mulf %59, %63 : vector<16x16xf32>
    %65 = arith.truncf %64 : vector<16x16xf32> to vector<16x16xbf16>
    %cst_21 = arith.constant dense<0.000000e+00> : vector<16x8xf32>
    %66 = tpu.matmul %65, %54, %cst_21 {dimension_numbers = #tpu.dot_dimension_numbers<[1], [0], [0], [1], [0, 0, 1, 1], [], []>} : vector<16x16xbf16>, vector<16x8xbf16>, vector<16x8xf32> -> vector<16x8xf32>
    %67 = vector.extract_strided_slice %12 {offsets = [0, 24], sizes = [16, 8], strides = [1, 1]} : vector<16x96xf32> to vector<16x8xf32>
    %68 = arith.truncf %67 : vector<16x8xf32> to vector<16x8xbf16>
    %69 = vector.extract_strided_slice %12 {offsets = [0, 56], sizes = [16, 8], strides = [1, 1]} : vector<16x96xf32> to vector<16x8xf32>
    %70 = arith.truncf %69 : vector<16x8xf32> to vector<16x8xbf16>
    %71 = vector.extract_strided_slice %12 {offsets = [0, 88], sizes = [16, 8], strides = [1, 1]} : vector<16x96xf32> to vector<16x8xf32>
    %72 = arith.truncf %71 : vector<16x8xf32> to vector<16x8xbf16>
    %cst_22 = arith.constant dense<0.000000e+00> : vector<16x16xf32>
    %73 = tpu.matmul %68, %70, %cst_22 {dimension_numbers = #tpu.dot_dimension_numbers<[1], [1], [0], [0], [0, 0, 1, 0], [], []>} : vector<16x8xbf16>, vector<16x8xbf16>, vector<16x16xf32> -> vector<16x16xf32>
    %cst_23 = arith.constant 0.353553385 : f32
    %74 = vector.broadcast %cst_23 : f32 to vector<16x16xf32>
    %75 = arith.mulf %73, %74 : vector<16x16xf32>
    %76 = arith.addf %75, %4 : vector<16x16xf32>
    %77 = math.exp %76 : vector<16x16xf32>
    %cst_24 = arith.constant dense<0.000000e+00> : vector<16xf32>
    %78 = vector.multi_reduction <add>, %77, %cst_24 [1] : vector<16x16xf32> to vector<16xf32>
    %79 = vector.shape_cast %78 : vector<16xf32> to vector<16x1xf32>
    %80 = tpu.reciprocal %79 {approx = true} : vector<16x1xf32> -> vector<16x1xf32>
    %81 = vector.broadcast %80 : vector<16x1xf32> to vector<16x16xf32>
    %82 = arith.mulf %77, %81 : vector<16x16xf32>
    %83 = arith.truncf %82 : vector<16x16xf32> to vector<16x16xbf16>
    %cst_25 = arith.constant dense<0.000000e+00> : vector<16x8xf32>
    %84 = tpu.matmul %83, %72, %cst_25 {dimension_numbers = #tpu.dot_dimension_numbers<[1], [0], [0], [1], [0, 0, 1, 1], [], []>} : vector<16x16xbf16>, vector<16x8xbf16>, vector<16x8xf32> -> vector<16x8xf32>
    %85 = tpu.concatenate %30, %48, %66, %84 in 1 : vector<16x8xf32>, vector<16x8xf32>, vector<16x8xf32>, vector<16x8xf32> -> vector<16x32xf32>
    %86 = arith.truncf %85 : vector<16x32xf32> to vector<16x32xbf16>
    %c0_26 = arith.constant 0 : index
    %c0_27 = arith.constant 0 : index
    %c0_28 = arith.constant 0 : index
    %87 = vector.load %arg10[%c0_26, %c0_27, %c0_28] : memref<1x32x32xbf16, #tpu.memory_space<vmem>>, vector<1x32x32xbf16>
    %88 = vector.shape_cast %87 : vector<1x32x32xbf16> to vector<32x32xbf16>
    %cst_29 = arith.constant dense<0.000000e+00> : vector<16x32xf32>
    %89 = tpu.matmul %86, %88, %cst_29 {dimension_numbers = #tpu.dot_dimension_numbers<[1], [0], [0], [1], [0, 0, 1, 1], [], []>} : vector<16x32xbf16>, vector<32x32xbf16>, vector<16x32xf32> -> vector<16x32xf32>
    %c0_30 = arith.constant 0 : index
    %c0_31 = arith.constant 0 : index
    %c0_32 = arith.constant 0 : index
    %90 = vector.load %arg11[%c0_30, %c0_31, %c0_32] : memref<1x1x32xf32, #tpu.memory_space<vmem>>, vector<1x1x32xf32>
    %91 = vector.shape_cast %90 : vector<1x1x32xf32> to vector<1x32xf32>
    %92 = vector.broadcast %91 : vector<1x32xf32> to vector<16x32xf32>
    %93 = arith.addf %89, %92 : vector<16x32xf32>
    %94 = arith.addf %93, %3 : vector<16x32xf32>
    %c0_33 = arith.constant 0 : index
    %c0_34 = arith.constant 0 : index
    %c0_35 = arith.constant 0 : index
    %95 = vector.load %arg12[%c0_33, %c0_34, %c0_35] : memref<1x1x32xf32, #tpu.memory_space<vmem>>, vector<1x1x32xf32>
    %96 = vector.shape_cast %95 : vector<1x1x32xf32> to vector<1x32xf32>
    %c0_36 = arith.constant 0 : index
    %c0_37 = arith.constant 0 : index
    %c0_38 = arith.constant 0 : index
    %97 = vector.load %arg13[%c0_36, %c0_37, %c0_38] : memref<1x1x32xf32, #tpu.memory_space<vmem>>, vector<1x1x32xf32>
    %98 = vector.shape_cast %97 : vector<1x1x32xf32> to vector<1x32xf32>
    %cst_39 = arith.constant dense<0.000000e+00> : vector<16xf32>
    %99 = vector.multi_reduction <add>, %94, %cst_39 [1] : vector<16x32xf32> to vector<16xf32>
    %100 = vector.shape_cast %99 : vector<16xf32> to vector<16x1xf32>
    %cst_40 = arith.constant 3.200000e+01 : f32
    %101 = vector.broadcast %cst_40 : f32 to vector<16x1xf32>
    %102 = arith.divf %100, %101 : vector<16x1xf32>
    %103 = vector.broadcast %102 : vector<16x1xf32> to vector<16x32xf32>
    %104 = arith.subf %94, %103 : vector<16x32xf32>
    %105 = arith.mulf %104, %104 : vector<16x32xf32>
    %cst_41 = arith.constant dense<0.000000e+00> : vector<16xf32>
    %106 = vector.multi_reduction <add>, %105, %cst_41 [1] : vector<16x32xf32> to vector<16xf32>
    %107 = vector.shape_cast %106 : vector<16xf32> to vector<16x1xf32>
    %cst_42 = arith.constant 3.200000e+01 : f32
    %108 = vector.broadcast %cst_42 : f32 to vector<16x1xf32>
    %109 = arith.divf %107, %108 : vector<16x1xf32>
    %110 = vector.broadcast %102 : vector<16x1xf32> to vector<16x32xf32>
    %111 = arith.subf %94, %110 : vector<16x32xf32>
    %cst_43 = arith.constant 9.99999996E-13 : f32
    %112 = vector.broadcast %cst_43 : f32 to vector<16x1xf32>
    %113 = arith.addf %109, %112 : vector<16x1xf32>
    %114 = math.rsqrt %113 : vector<16x1xf32>
    %115 = vector.broadcast %114 : vector<16x1xf32> to vector<16x32xf32>
    %116 = arith.mulf %111, %115 : vector<16x32xf32>
    %117 = vector.broadcast %96 : vector<1x32xf32> to vector<16x32xf32>
    %118 = arith.mulf %116, %117 : vector<16x32xf32>
    %119 = vector.broadcast %98 : vector<1x32xf32> to vector<16x32xf32>
    %120 = arith.addf %118, %119 : vector<16x32xf32>
    %121 = arith.truncf %120 : vector<16x32xf32> to vector<16x32xbf16>
    %c0_44 = arith.constant 0 : index
    %c0_45 = arith.constant 0 : index
    %c0_46 = arith.constant 0 : index
    %122 = vector.load %arg14[%c0_44, %c0_45, %c0_46] : memref<1x32x64xbf16, #tpu.memory_space<vmem>>, vector<1x32x64xbf16>
    %123 = vector.shape_cast %122 : vector<1x32x64xbf16> to vector<32x64xbf16>
    %cst_47 = arith.constant dense<0.000000e+00> : vector<16x64xf32>
    %124 = tpu.matmul %121, %123, %cst_47 {dimension_numbers = #tpu.dot_dimension_numbers<[1], [0], [0], [1], [0, 0, 1, 1], [], []>} : vector<16x32xbf16>, vector<32x64xbf16>, vector<16x64xf32> -> vector<16x64xf32>
    %c0_48 = arith.constant 0 : index
    %c0_49 = arith.constant 0 : index
    %c0_50 = arith.constant 0 : index
    %125 = vector.load %arg15[%c0_48, %c0_49, %c0_50] : memref<1x1x64xf32, #tpu.memory_space<vmem>>, vector<1x1x64xf32>
    %126 = vector.shape_cast %125 : vector<1x1x64xf32> to vector<1x64xf32>
    %127 = vector.broadcast %126 : vector<1x64xf32> to vector<16x64xf32>
    %128 = arith.addf %124, %127 : vector<16x64xf32>
    %cst_51 = arith.constant 5.000000e-01 : f32
    %129 = vector.broadcast %cst_51 : f32 to vector<16x64xf32>
    %130 = arith.mulf %129, %128 : vector<16x64xf32>
    %cst_52 = arith.constant 4.471500e-02 : f32
    %131 = vector.broadcast %cst_52 : f32 to vector<16x64xf32>
    %132 = arith.mulf %131, %128 : vector<16x64xf32>
    %133 = arith.mulf %132, %128 : vector<16x64xf32>
    %134 = arith.mulf %133, %128 : vector<16x64xf32>
    %135 = arith.addf %128, %134 : vector<16x64xf32>
    %cst_53 = arith.constant 0.797884583 : f32
    %136 = vector.broadcast %cst_53 : f32 to vector<16x64xf32>
    %137 = arith.mulf %136, %135 : vector<16x64xf32>
    %138 = math.tanh %137 : vector<16x64xf32>
    %cst_54 = arith.constant 1.000000e+00 : f32
    %139 = vector.broadcast %cst_54 : f32 to vector<16x64xf32>
    %140 = arith.addf %139, %138 : vector<16x64xf32>
    %141 = arith.mulf %130, %140 : vector<16x64xf32>
    %142 = arith.truncf %141 : vector<16x64xf32> to vector<16x64xbf16>
    %c0_55 = arith.constant 0 : index
    %c0_56 = arith.constant 0 : index
    %c0_57 = arith.constant 0 : index
    %143 = vector.load %arg16[%c0_55, %c0_56, %c0_57] : memref<1x64x32xbf16, #tpu.memory_space<vmem>>, vector<1x64x32xbf16>
    %144 = vector.shape_cast %143 : vector<1x64x32xbf16> to vector<64x32xbf16>
    %cst_58 = arith.constant dense<0.000000e+00> : vector<16x32xf32>
    %145 = tpu.matmul %142, %144, %cst_58 {dimension_numbers = #tpu.dot_dimension_numbers<[1], [0], [0], [1], [0, 0, 1, 1], [], []>} : vector<16x64xbf16>, vector<64x32xbf16>, vector<16x32xf32> -> vector<16x32xf32>
    %c0_59 = arith.constant 0 : index
    %c0_60 = arith.constant 0 : index
    %c0_61 = arith.constant 0 : index
    %146 = vector.load %arg17[%c0_59, %c0_60, %c0_61] : memref<1x1x32xf32, #tpu.memory_space<vmem>>, vector<1x1x32xf32>
    %147 = vector.shape_cast %146 : vector<1x1x32xf32> to vector<1x32xf32>
    %148 = vector.broadcast %147 : vector<1x32xf32> to vector<16x32xf32>
    %149 = arith.addf %145, %148 : vector<16x32xf32>
    %150 = arith.addf %149, %120 : vector<16x32xf32>
    %c0_62 = arith.constant 0 : index
    %c0_63 = arith.constant 0 : index
    %c0_64 = arith.constant 0 : index
    %151 = vector.load %arg18[%c0_62, %c0_63, %c0_64] : memref<1x1x32xf32, #tpu.memory_space<vmem>>, vector<1x1x32xf32>
    %152 = vector.shape_cast %151 : vector<1x1x32xf32> to vector<1x32xf32>
    %c0_65 = arith.constant 0 : index
    %c0_66 = arith.constant 0 : index
    %c0_67 = arith.constant 0 : index
    %153 = vector.load %arg19[%c0_65, %c0_66, %c0_67] : memref<1x1x32xf32, #tpu.memory_space<vmem>>, vector<1x1x32xf32>
    %154 = vector.shape_cast %153 : vector<1x1x32xf32> to vector<1x32xf32>
    %cst_68 = arith.constant dense<0.000000e+00> : vector<16xf32>
    %155 = vector.multi_reduction <add>, %150, %cst_68 [1] : vector<16x32xf32> to vector<16xf32>
    %156 = vector.shape_cast %155 : vector<16xf32> to vector<16x1xf32>
    %cst_69 = arith.constant 3.200000e+01 : f32
    %157 = vector.broadcast %cst_69 : f32 to vector<16x1xf32>
    %158 = arith.divf %156, %157 : vector<16x1xf32>
    %159 = vector.broadcast %158 : vector<16x1xf32> to vector<16x32xf32>
    %160 = arith.subf %150, %159 : vector<16x32xf32>
    %161 = arith.mulf %160, %160 : vector<16x32xf32>
    %cst_70 = arith.constant dense<0.000000e+00> : vector<16xf32>
    %162 = vector.multi_reduction <add>, %161, %cst_70 [1] : vector<16x32xf32> to vector<16xf32>
    %163 = vector.shape_cast %162 : vector<16xf32> to vector<16x1xf32>
    %cst_71 = arith.constant 3.200000e+01 : f32
    %164 = vector.broadcast %cst_71 : f32 to vector<16x1xf32>
    %165 = arith.divf %163, %164 : vector<16x1xf32>
    %166 = vector.broadcast %158 : vector<16x1xf32> to vector<16x32xf32>
    %167 = arith.subf %150, %166 : vector<16x32xf32>
    %cst_72 = arith.constant 9.99999996E-13 : f32
    %168 = vector.broadcast %cst_72 : f32 to vector<16x1xf32>
    %169 = arith.addf %165, %168 : vector<16x1xf32>
    %170 = math.rsqrt %169 : vector<16x1xf32>
    %171 = vector.broadcast %170 : vector<16x1xf32> to vector<16x32xf32>
    %172 = arith.mulf %167, %171 : vector<16x32xf32>
    %173 = vector.broadcast %152 : vector<1x32xf32> to vector<16x32xf32>
    %174 = arith.mulf %172, %173 : vector<16x32xf32>
    %175 = vector.broadcast %154 : vector<1x32xf32> to vector<16x32xf32>
    %176 = arith.addf %174, %175 : vector<16x32xf32>
    %c0_73 = arith.constant 0 : index
    %c0_74 = arith.constant 0 : index
    %177 = vector.load %arg25[%c0_73, %c0_74] : memref<16x32xf32, #tpu.memory_space<vmem>>, vector<16x32xf32>
    tpu.vector_store %arg25[%c0_73, %c0_74], %176 {strides = array<i32>} : memref<16x32xf32, #tpu.memory_space<vmem>>, vector<16x32xf32>,
    %c1_i32 = arith.constant 1 : i32
    %178 = arith.cmpi eq, %arg0, %c1_i32 : i32
    %179 = arith.extui %178 : i1 to i32
    %c0_i32_75 = arith.constant 0 : i32
    %180 = arith.cmpi ne, %179, %c0_i32_75 : i32
    scf.if %180 {
      %181 = vector.extract_strided_slice %176 {offsets = [0, 0], sizes = [1, 32], strides = [1, 1]} : vector<16x32xf32> to vector<1x32xf32>
      %182 = vector.extract_strided_slice %176 {offsets = [8, 0], sizes = [1, 32], strides = [1, 1]} : vector<16x32xf32> to vector<1x32xf32>
      %183 = tpu.concatenate %181, %182 in 0 : vector<1x32xf32>, vector<1x32xf32> -> vector<2x32xf32>
      %184 = arith.truncf %183 : vector<2x32xf32> to vector<2x32xbf16>
      %c0_76 = arith.constant 0 : index
      %c0_77 = arith.constant 0 : index
      %185 = vector.load %arg20[%c0_76, %c0_77] : memref<32x32xbf16, #tpu.memory_space<vmem>>, vector<32x32xbf16>
      %cst_78 = arith.constant dense<0.000000e+00> : vector<2x32xf32>
      %186 = tpu.matmul %184, %185, %cst_78 {dimension_numbers = #tpu.dot_dimension_numbers<[1], [0], [0], [1], [0, 0, 1, 1], [], []>} : vector<2x32xbf16>, vector<32x32xbf16>, vector<2x32xf32> -> vector<2x32xf32>
      %c0_79 = arith.constant 0 : index
      %c0_80 = arith.constant 0 : index
      %187 = vector.load %arg21[%c0_79, %c0_80] : memref<1x32xf32, #tpu.memory_space<vmem>>, vector<1x32xf32>
      %188 = vector.broadcast %187 : vector<1x32xf32> to vector<2x32xf32>
      %189 = arith.addf %186, %188 : vector<2x32xf32>
      %190 = math.tanh %189 : vector<2x32xf32>
      %191 = arith.truncf %190 : vector<2x32xf32> to vector<2x32xbf16>
      %c0_81 = arith.constant 0 : index
      %c0_82 = arith.constant 0 : index
      %192 = vector.load %arg22[%c0_81, %c0_82] : memref<32x7xbf16, #tpu.memory_space<vmem>>, vector<32x7xbf16>
      %cst_83 = arith.constant dense<0.000000e+00> : vector<2x7xf32>
      %193 = tpu.matmul %191, %192, %cst_83 {dimension_numbers = #tpu.dot_dimension_numbers<[1], [0], [0], [1], [0, 0, 1, 1], [], []>} : vector<2x32xbf16>, vector<32x7xbf16>, vector<2x7xf32> -> vector<2x7xf32>
      %c0_84 = arith.constant 0 : index
      %c0_85 = arith.constant 0 : index
      %194 = vector.load %arg23[%c0_84, %c0_85] : memref<1x7xf32, #tpu.memory_space<vmem>>, vector<1x7xf32>
      %195 = vector.broadcast %194 : vector<1x7xf32> to vector<2x7xf32>
      %196 = arith.addf %193, %195 : vector<2x7xf32>
      %c0_86 = arith.constant 0 : index
      %c0_87 = arith.constant 0 : index
      %197 = vector.load %arg24[%c0_86, %c0_87] : memref<2x7xf32, #tpu.memory_space<vmem>>, vector<2x7xf32>
      tpu.vector_store %arg24[%c0_86, %c0_87], %196 {strides = array<i32>} : memref<2x7xf32, #tpu.memory_space<vmem>>, vector<2x7xf32>,
    } else {
    }
    return
  }
  func.func @transform_0(%arg0: i32) -> (i32, i32) {
    %c0_i32 = arith.constant 0 : i32
    %c0_i32_0 = arith.constant 0 : i32
    %c0_i32_1 = arith.constant 0 : i32
    return %c0_i32, %c0_i32_0 : i32, i32
  }
  func.func @transform_1(%arg0: i32) -> (i32, i32) {
    %c0_i32 = arith.constant 0 : i32
    %c0_i32_0 = arith.constant 0 : i32
    %c0_i32_1 = arith.constant 0 : i32
    return %c0_i32, %c0_i32_0 : i32, i32
  }
  func.func @transform_2(%arg0: i32) -> (i32, i32) {
    %c0_i32 = arith.constant 0 : i32
    %c0_i32_0 = arith.constant 0 : i32
    %c0_i32_1 = arith.constant 0 : i32
    return %c0_i32, %c0_i32_0 : i32, i32
  }
  func.func @transform_3(%arg0: i32) -> (i32, i32) {
    %c0_i32 = arith.constant 0 : i32
    %c0_i32_0 = arith.constant 0 : i32
    %c0_i32_1 = arith.constant 0 : i32
    return %c0_i32, %c0_i32_0 : i32, i32
  }
  func.func @transform_4(%arg0: i32) -> (i32, i32) {
    %c0_i32 = arith.constant 0 : i32
    %c0_i32_0 = arith.constant 0 : i32
    %c0_i32_1 = arith.constant 0 : i32
    return %c0_i32, %c0_i32_0 : i32, i32
  }
  func.func @transform_5(%arg0: i32) -> (i32, i32) {
    %c0_i32 = arith.constant 0 : i32
    %c0_i32_0 = arith.constant 0 : i32
    %c0_i32_1 = arith.constant 0 : i32
    return %c0_i32, %c0_i32_0 : i32, i32
  }
  func.func @transform_6(%arg0: i32) -> (i32, i32) {
    %c0_i32 = arith.constant 0 : i32
    %c0_i32_0 = arith.constant 0 : i32
    %c0_i32_1 = arith.constant 0 : i32
    return %c0_i32, %c0_i32_0 : i32, i32
  }
  func.func @transform_7(%arg0: i32) -> (i32, i32, i32) {
    %c0_i32 = arith.constant 0 : i32
    %c0_i32_0 = arith.constant 0 : i32
    %c0_i32_1 = arith.constant 0 : i32
    return %arg0, %c0_i32, %c0_i32_0 : i32, i32, i32
  }
  func.func @transform_8(%arg0: i32) -> (i32, i32, i32) {
    %c0_i32 = arith.constant 0 : i32
    %c0_i32_0 = arith.constant 0 : i32
    %c0_i32_1 = arith.constant 0 : i32
    return %arg0, %c0_i32, %c0_i32_0 : i32, i32, i32
  }
  func.func @transform_9(%arg0: i32) -> (i32, i32, i32) {
    %c0_i32 = arith.constant 0 : i32
    %c0_i32_0 = arith.constant 0 : i32
    %c0_i32_1 = arith.constant 0 : i32
    return %arg0, %c0_i32, %c0_i32_0 : i32, i32, i32
  }
  func.func @transform_10(%arg0: i32) -> (i32, i32, i32) {
    %c0_i32 = arith.constant 0 : i32
    %c0_i32_0 = arith.constant 0 : i32
    %c0_i32_1 = arith.constant 0 : i32
    return %arg0, %c0_i32, %c0_i32_0 : i32, i32, i32
  }
  func.func @transform_11(%arg0: i32) -> (i32, i32, i32) {
    %c0_i32 = arith.constant 0 : i32
    %c0_i32_0 = arith.constant 0 : i32
    %c0_i32_1 = arith.constant 0 : i32
    return %arg0, %c0_i32, %c0_i32_0 : i32, i32, i32
  }
  func.func @transform_12(%arg0: i32) -> (i32, i32, i32) {
    %c0_i32 = arith.constant 0 : i32
    %c0_i32_0 = arith.constant 0 : i32
    %c0_i32_1 = arith.constant 0 : i32
    return %arg0, %c0_i32, %c0_i32_0 : i32, i32, i32
  }
  func.func @transform_13(%arg0: i32) -> (i32, i32, i32) {
    %c0_i32 = arith.constant 0 : i32
    %c0_i32_0 = arith.constant 0 : i32
    %c0_i32_1 = arith.constant 0 : i32
    return %arg0, %c0_i32, %c0_i32_0 : i32, i32, i32
  }
  func.func @transform_14(%arg0: i32) -> (i32, i32, i32) {
    %c0_i32 = arith.constant 0 : i32
    %c0_i32_0 = arith.constant 0 : i32
    %c0_i32_1 = arith.constant 0 : i32
    return %arg0, %c0_i32, %c0_i32_0 : i32, i32, i32
  }
  func.func @transform_15(%arg0: i32) -> (i32, i32, i32) {
    %c0_i32 = arith.constant 0 : i32
    %c0_i32_0 = arith.constant 0 : i32
    %c0_i32_1 = arith.constant 0 : i32
    return %arg0, %c0_i32, %c0_i32_0 : i32, i32, i32
  }
  func.func @transform_16(%arg0: i32) -> (i32, i32, i32) {
    %c0_i32 = arith.constant 0 : i32
    %c0_i32_0 = arith.constant 0 : i32
    %c0_i32_1 = arith.constant 0 : i32
    return %arg0, %c0_i32, %c0_i32_0 : i32, i32, i32
  }
  func.func @transform_17(%arg0: i32) -> (i32, i32, i32) {
    %c0_i32 = arith.constant 0 : i32
    %c0_i32_0 = arith.constant 0 : i32
    %c0_i32_1 = arith.constant 0 : i32
    return %arg0, %c0_i32, %c0_i32_0 : i32, i32, i32
  }
  func.func @transform_18(%arg0: i32) -> (i32, i32, i32) {
    %c0_i32 = arith.constant 0 : i32
    %c0_i32_0 = arith.constant 0 : i32
    %c0_i32_1 = arith.constant 0 : i32
    return %arg0, %c0_i32, %c0_i32_0 : i32, i32, i32
  }
  func.func @transform_19(%arg0: i32) -> (i32, i32) {
    %c0_i32 = arith.constant 0 : i32
    %c0_i32_0 = arith.constant 0 : i32
    %c0_i32_1 = arith.constant 0 : i32
    return %c0_i32, %c0_i32_0 : i32, i32
  }
  func.func @transform_20(%arg0: i32) -> (i32, i32) {
    %c0_i32 = arith.constant 0 : i32
    %c0_i32_0 = arith.constant 0 : i32
    %c0_i32_1 = arith.constant 0 : i32
    return %c0_i32, %c0_i32_0 : i32, i32
  }
  func.func @transform_21(%arg0: i32) -> (i32, i32) {
    %c0_i32 = arith.constant 0 : i32
    %c0_i32_0 = arith.constant 0 : i32
    %c0_i32_1 = arith.constant 0 : i32
    return %c0_i32, %c0_i32_0 : i32, i32
  }
  func.func @transform_22(%arg0: i32) -> (i32, i32) {
    %c0_i32 = arith.constant 0 : i32
    %c0_i32_0 = arith.constant 0 : i32
    %c0_i32_1 = arith.constant 0 : i32
    return %c0_i32, %c0_i32_0 : i32, i32
  }
  func.func @transform_23(%arg0: i32) -> (i32, i32) {
    %c0_i32 = arith.constant 0 : i32
    %c0_i32_0 = arith.constant 0 : i32
    %c0_i32_1 = arith.constant 0 : i32
    return %c0_i32, %c0_i32_0 : i32, i32
  }
}

</mosaic_0001>

<llo_original>
// kernel: custom_bert_forward.1
$region0: #{custom_bert_forward.1}
  #allocation0 [shape = 'u32[]', space=smem, size = 0x4, offset = 0x4, fixed_abs, tag = 'smem constant byte address 0x4 - core index']
  #allocation1 [shape = 'u32[72,128]{1,0:T(1,128)}', space=vmem, size = 0x9000, scoped, tag = 'internal scratch']
  #allocation2 [shape = 'f32[16,32]{1,0:T(8,128)}', space=vmem, size = 0x2000, scoped, tag = 'scratch operand']
  %s0 = inlined_call_operand.vmem [shape: s32[16,1], index: 0, kind: input, shape index: {}]
  %s1 = inlined_call_operand.vmem [shape: f32[16,16], index: 1, kind: input, shape index: {}]
  %s2 = inlined_call_operand.vmem [shape: bf16[128,32], index: 2, kind: input, shape index: {}]
  %s3 = inlined_call_operand.vmem [shape: f32[32,32], index: 3, kind: input, shape index: {}]
  %s4 = inlined_call_operand.vmem [shape: f32[2,32], index: 4, kind: input, shape index: {}]
  %s5 = inlined_call_operand.vmem [shape: f32[1,32], index: 5, kind: input, shape index: {}]
  %s6 = inlined_call_operand.vmem [shape: f32[1,32], index: 6, kind: input, shape index: {}]
  %s7 = inlined_call_operand.vmem [shape: bf16[2,32,96], index: 7, kind: input, shape index: {}]
  %s8 = inlined_call_operand.vmem [shape: f32[2,1,96], index: 8, kind: input, shape index: {}]
  %s9 = inlined_call_operand.vmem [shape: bf16[2,32,32], index: 9, kind: input, shape index: {}]
  %s10 = inlined_call_operand.vmem [shape: f32[2,1,32], index: 10, kind: input, shape index: {}]
  %s11 = inlined_call_operand.vmem [shape: f32[2,1,32], index: 11, kind: input, shape index: {}]
  %s12 = inlined_call_operand.vmem [shape: f32[2,1,32], index: 12, kind: input, shape index: {}]
  %s13 = inlined_call_operand.vmem [shape: bf16[2,32,64], index: 13, kind: input, shape index: {}]
  %s14 = inlined_call_operand.vmem [shape: f32[2,1,64], index: 14, kind: input, shape index: {}]
  %s15 = inlined_call_operand.vmem [shape: bf16[2,64,32], index: 15, kind: input, shape index: {}]
  %s16 = inlined_call_operand.vmem [shape: f32[2,1,32], index: 16, kind: input, shape index: {}]
  %s17 = inlined_call_operand.vmem [shape: f32[2,1,32], index: 17, kind: input, shape index: {}]
  %s18 = inlined_call_operand.vmem [shape: f32[2,1,32], index: 18, kind: input, shape index: {}]
  %s19 = inlined_call_operand.vmem [shape: bf16[32,32], index: 19, kind: input, shape index: {}]
  %s20 = inlined_call_operand.vmem [shape: f32[1,32], index: 20, kind: input, shape index: {}]
  %s21 = inlined_call_operand.vmem [shape: bf16[32,7], index: 21, kind: input, shape index: {}]
  %s22 = inlined_call_operand.vmem [shape: f32[1,7], index: 22, kind: input, shape index: {}]
  %s23 = inlined_call_operand.hbm [shape: f32[2,7], index: 23, kind: output, shape index: {}]
  %s24 = sld [smem:[#allocation0]]
  $region133: #{custom_bert_forward.1} parent=0
    _
  %s26 = ssub.s32 1, %s24
  %s27 = scalar_select 0, %s26, %s24
  $region1: #{custom_bert_forward.1} parent=0
    #allocation3 [shape = 'u8[1024]{0}', space=vmem, size = 0x400, scoped, tag = 'output window, operand 0, single buffered']
    #allocation4 [shape = 's32[2]{0}', space=sflag, size = 0x8, scoped, tag = 'scoped memory for custom_bert_forward.1']
    %28 = vsyncpa [#allocation4], 0
    loop: start=0, step=1, limit=4
    $region2: #{custom_bert_forward.1} parent=1 // loop_pre_header
      _
    $region3: #{custom_bert_forward.1} parent=1 // loop_header
      %s30 = sphi 0, %s34
      %p31 = scmp.ge.s32.totalorder %s30, 4
      %s38 = sphi 0, %s38
      %s40 = sphi 0, %s38
      %s41 = sphi 0, %s40
      %s55 = sphi 0, %s41
      %s59 = sphi 0, %s59
      %s61 = sphi 0, %s59
      %s62 = sphi 0, %s61
      %s76 = sphi 0, %s62
      %s80 = sphi 0, %s80
      %s82 = sphi 0, %s80
      %s83 = sphi 0, %s82
      %s97 = sphi 0, %s83
      %s101 = sphi 0, %s101
      %s103 = sphi 0, %s101
      %s104 = sphi 0, %s103
      %s118 = sphi 0, %s104
      %s122 = sphi 0, %s122
      %s124 = sphi 0, %s122
      %s125 = sphi 0, %s124
      %s139 = sphi 0, %s125
      %s143 = sphi 0, %s143
      %s145 = sphi 0, %s143
      %s146 = sphi 0, %s145
      %s160 = sphi 0, %s146
      %s164 = sphi 0, %s164
      %s166 = sphi 0, %s164
      %s167 = sphi 0, %s166
      %s181 = sphi 0, %s167
      %s187 = sphi 0, %s189
      %s190 = sphi 0, %s187
      %s191 = sphi 0, %s190
      %s207 = sphi 0, %s191
      %s213 = sphi 0, %s215
      %s216 = sphi 0, %s213
      %s217 = sphi 0, %s216
      %s233 = sphi 0, %s217
      %s239 = sphi 0, %s241
      %s242 = sphi 0, %s239
      %s243 = sphi 0, %s242
      %s259 = sphi 0, %s243
      %s265 = sphi 0, %s267
      %s268 = sphi 0, %s265
      %s269 = sphi 0, %s268
      %s285 = sphi 0, %s269
      %s291 = sphi 0, %s293
      %s294 = sphi 0, %s291
      %s295 = sphi 0, %s294
      %s311 = sphi 0, %s295
      %s317 = sphi 0, %s319
      %s320 = sphi 0, %s317
      %s321 = sphi 0, %s320
      %s337 = sphi 0, %s321
      %s343 = sphi 0, %s345
      %s346 = sphi 0, %s343
      %s347 = sphi 0, %s346
      %s363 = sphi 0, %s347
      %s369 = sphi 0, %s371
      %s372 = sphi 0, %s369
      %s373 = sphi 0, %s372
      %s389 = sphi 0, %s373
      %s395 = sphi 0, %s397
      %s398 = sphi 0, %s395
      %s399 = sphi 0, %s398
      %s415 = sphi 0, %s399
      %s421 = sphi 0, %s423
      %s424 = sphi 0, %s421
      %s425 = sphi 0, %s424
      %s441 = sphi 0, %s425
      %s447 = sphi 0, %s449
      %s450 = sphi 0, %s447
      %s451 = sphi 0, %s450
      %s467 = sphi 0, %s451
      %s473 = sphi 0, %s475
      %s476 = sphi 0, %s473
      %s477 = sphi 0, %s476
      %s493 = sphi 0, %s477
      %s497 = sphi 0, %s497
      %s499 = sphi 0, %s497
      %s500 = sphi 0, %s499
      %s514 = sphi 0, %s500
      %s518 = sphi 0, %s518
      %s520 = sphi 0, %s518
      %s521 = sphi 0, %s520
      %s535 = sphi 0, %s521
      %s539 = sphi 0, %s539
      %s541 = sphi 0, %s539
      %s542 = sphi 0, %s541
      %s556 = sphi 0, %s542
      %s560 = sphi 0, %s560
      %s562 = sphi 0, %s560
      %s563 = sphi 0, %s562
      %s577 = sphi 0, %s563
      %s581 = sphi 0, %s581
      %s583 = sphi 0, %s581
      %s584 = sphi 0, %s583
      %s598 = sphi 0, %s584
    $region4: #{custom_bert_forward.1} parent=1 // loop_header_branch
      %33 = sbr.rel (%p31) target = $region8
    $region5: #{custom_bert_forward.1} parent=1 // loop_body
      %s35 = ssub.s32 %s30, 1
      %s36 = ssub.s32 %s30, 2
      %s37 = sadd.s32 %s30, 1
      %s39 = sadd.s32 %s38, 1
      %p42 = scmp.eq.s32.totalorder %s30, 1
      %p43 = scmp.ne.s32.totalorder %s38, %s40
      %p44 = scmp.eq.s32.totalorder %s30, 0
      %p45 = por %p43, %p44
      %p46 = scmp.ne.s32.totalorder %s38, %s40
      %p47 = scmp.eq.s32.totalorder %s35, 1
      %p48 = por %p46, %p47
      %p49 = scmp.ne.s32.totalorder %s40, %s41
      %p50 = scmp.eq.s32.totalorder %s35, 0
      %p51 = por %p49, %p50
      %p52 = scmp.ne.s32.totalorder %s40, %s41
      %p53 = scmp.eq.s32.totalorder %s36, 1
      %p54 = por %p52, %p53
      %p56 = scmp.ne.s32.totalorder %s41, %s55
      %p57 = scmp.eq.s32.totalorder %s36, 0
      %p58 = por %p56, %p57
      %s60 = sadd.s32 %s59, 1
      %p63 = scmp.eq.s32.totalorder %s30, 1
      %p64 = scmp.ne.s32.totalorder %s59, %s61
      %p65 = scmp.eq.s32.totalorder %s30, 0
      %p66 = por %p64, %p65
      %p67 = scmp.ne.s32.totalorder %s59, %s61
      %p68 = scmp.eq.s32.totalorder %s35, 1
      %p69 = por %p67, %p68
      %p70 = scmp.ne.s32.totalorder %s61, %s62
      %p71 = scmp.eq.s32.totalorder %s35, 0
      %p72 = por %p70, %p71
      %p73 = scmp.ne.s32.totalorder %s61, %s62
      %p74 = scmp.eq.s32.totalorder %s36, 1
      %p75 = por %p73, %p74
      %p77 = scmp.ne.s32.totalorder %s62, %s76
      %p78 = scmp.eq.s32.totalorder %s36, 0
      %p79 = por %p77, %p78
      %s81 = sadd.s32 %s80, 1
      %p84 = scmp.eq.s32.totalorder %s30, 1
      %p85 = scmp.ne.s32.totalorder %s80, %s82
      %p86 = scmp.eq.s32.totalorder %s30, 0
      %p87 = por %p85, %p86
      %p88 = scmp.ne.s32.totalorder %s80, %s82
      %p89 = scmp.eq.s32.totalorder %s35, 1
      %p90 = por %p88, %p89
      %p91 = scmp.ne.s32.totalorder %s82, %s83
      %p92 = scmp.eq.s32.totalorder %s35, 0
      %p93 = por %p91, %p92
      %p94 = scmp.ne.s32.totalorder %s82, %s83
      %p95 = scmp.eq.s32.totalorder %s36, 1
      %p96 = por %p94, %p95
      %p98 = scmp.ne.s32.totalorder %s83, %s97
      %p99 = scmp.eq.s32.totalorder %s36, 0
      %p100 = por %p98, %p99
      %s102 = sadd.s32 %s101, 1
      %p105 = scmp.eq.s32.totalorder %s30, 1
      %p106 = scmp.ne.s32.totalorder %s101, %s103
      %p107 = scmp.eq.s32.totalorder %s30, 0
      %p108 = por %p106, %p107
      %p109 = scmp.ne.s32.totalorder %s101, %s103
      %p110 = scmp.eq.s32.totalorder %s35, 1
      %p111 = por %p109, %p110
      %p112 = scmp.ne.s32.totalorder %s103, %s104
      %p113 = scmp.eq.s32.totalorder %s35, 0
      %p114 = por %p112, %p113
      %p115 = scmp.ne.s32.totalorder %s103, %s104
      %p116 = scmp.eq.s32.totalorder %s36, 1
      %p117 = por %p115, %p116
      %p119 = scmp.ne.s32.totalorder %s104, %s118
      %p120 = scmp.eq.s32.totalorder %s36, 0
      %p121 = por %p119, %p120
      %s123 = sadd.s32 %s122, 1
      %p126 = scmp.eq.s32.totalorder %s30, 1
      %p127 = scmp.ne.s32.totalorder %s122, %s124
      %p128 = scmp.eq.s32.totalorder %s30, 0
      %p129 = por %p127, %p128
      %p130 = scmp.ne.s32.totalorder %s122, %s124
      %p131 = scmp.eq.s32.totalorder %s35, 1
      %p132 = por %p130, %p131
      %p133 = scmp.ne.s32.totalorder %s124, %s125
      %p134 = scmp.eq.s32.totalorder %s35, 0
      %p135 = por %p133, %p134
      %p136 = scmp.ne.s32.totalorder %s124, %s125
      %p137 = scmp.eq.s32.totalorder %s36, 1
      %p138 = por %p136, %p137
      %p140 = scmp.ne.s32.totalorder %s125, %s139
      %p141 = scmp.eq.s32.totalorder %s36, 0
      %p142 = por %p140, %p141
      %s144 = sadd.s32 %s143, 1
      %p147 = scmp.eq.s32.totalorder %s30, 1
      %p148 = scmp.ne.s32.totalorder %s143, %s145
      %p149 = scmp.eq.s32.totalorder %s30, 0
      %p150 = por %p148, %p149
      %p151 = scmp.ne.s32.totalorder %s143, %s145
      %p152 = scmp.eq.s32.totalorder %s35, 1
      %p153 = por %p151, %p152
      %p154 = scmp.ne.s32.totalorder %s145, %s146
      %p155 = scmp.eq.s32.totalorder %s35, 0
      %p156 = por %p154, %p155
      %p157 = scmp.ne.s32.totalorder %s145, %s146
      %p158 = scmp.eq.s32.totalorder %s36, 1
      %p159 = por %p157, %p158
      %p161 = scmp.ne.s32.totalorder %s146, %s160
      %p162 = scmp.eq.s32.totalorder %s36, 0
      %p163 = por %p161, %p162
      %s165 = sadd.s32 %s164, 1
      %p168 = scmp.eq.s32.totalorder %s30, 1
      %p169 = scmp.ne.s32.totalorder %s164, %s166
      %p170 = scmp.eq.s32.totalorder %s30, 0
      %p171 = por %p169, %p170
      %p172 = scmp.ne.s32.totalorder %s164, %s166
      %p173 = scmp.eq.s32.totalorder %s35, 1
      %p174 = por %p172, %p173
      %p175 = scmp.ne.s32.totalorder %s166, %s167
      %p176 = scmp.eq.s32.totalorder %s35, 0
      %p177 = por %p175, %p176
      %p178 = scmp.ne.s32.totalorder %s166, %s167
      %p179 = scmp.eq.s32.totalorder %s36, 1
      %p180 = por %p178, %p179
      %p182 = scmp.ne.s32.totalorder %s167, %s181
      %p183 = scmp.eq.s32.totalorder %s36, 0
      %p184 = por %p182, %p183
      %s185 = ssub.s32 %s30, %s37
      %p186 = scmp.eq.s32.totalorder %s185, 0
      %s188 = sadd.s32 %s187, 1
      %s189 = scalar_select %p186, %s187, %s188
      %p192 = pneg %p186
      %p193 = scmp.eq.s32.totalorder %s30, 1
      %p194 = por %p192, %p193
      %p195 = scmp.ne.s32.totalorder %s187, %s190
      %p196 = scmp.eq.s32.totalorder %s30, 0
      %p197 = por %p195, %p196
      %p198 = scmp.ne.s32.totalorder %s187, %s190
      %p199 = scmp.eq.s32.totalorder %s35, 1
      %p200 = por %p198, %p199
      %p201 = scmp.ne.s32.totalorder %s190, %s191
      %p202 = scmp.eq.s32.totalorder %s35, 0
      %p203 = por %p201, %p202
      %p204 = scmp.ne.s32.totalorder %s190, %s191
      %p205 = scmp.eq.s32.totalorder %s36, 1
      %p206 = por %p204, %p205
      %p208 = scmp.ne.s32.totalorder %s191, %s207
      %p209 = scmp.eq.s32.totalorder %s36, 0
      %p210 = por %p208, %p209
      %s211 = ssub.s32 %s30, %s37
      %p212 = scmp.eq.s32.totalorder %s211, 0
      %s214 = sadd.s32 %s213, 1
      %s215 = scalar_select %p212, %s213, %s214
      %p218 = pneg %p212
      %p219 = scmp.eq.s32.totalorder %s30, 1
      %p220 = por %p218, %p219
      %p221 = scmp.ne.s32.totalorder %s213, %s216
      %p222 = scmp.eq.s32.totalorder %s30, 0
      %p223 = por %p221, %p222
      %p224 = scmp.ne.s32.totalorder %s213, %s216
      %p225 = scmp.eq.s32.totalorder %s35, 1
      %p226 = por %p224, %p225
      %p227 = scmp.ne.s32.totalorder %s216, %s217
      %p228 = scmp.eq.s32.totalorder %s35, 0
      %p229 = por %p227, %p228
      %p230 = scmp.ne.s32.totalorder %s216, %s217
      %p231 = scmp.eq.s32.totalorder %s36, 1
      %p232 = por %p230, %p231
      %p234 = scmp.ne.s32.totalorder %s217, %s233
      %p235 = scmp.eq.s32.totalorder %s36, 0
      %p236 = por %p234, %p235
      %s237 = ssub.s32 %s30, %s37
      %p238 = scmp.eq.s32.totalorder %s237, 0
      %s240 = sadd.s32 %s239, 1
      %s241 = scalar_select %p238, %s239, %s240
      %p244 = pneg %p238
      %p245 = scmp.eq.s32.totalorder %s30, 1
      %p246 = por %p244, %p245
      %p247 = scmp.ne.s32.totalorder %s239, %s242
      %p248 = scmp.eq.s32.totalorder %s30, 0
      %p249 = por %p247, %p248
      %p250 = scmp.ne.s32.totalorder %s239, %s242
      %p251 = scmp.eq.s32.totalorder %s35, 1
      %p252 = por %p250, %p251
      %p253 = scmp.ne.s32.totalorder %s242, %s243
      %p254 = scmp.eq.s32.totalorder %s35, 0
      %p255 = por %p253, %p254
      %p256 = scmp.ne.s32.totalorder %s242, %s243
      %p257 = scmp.eq.s32.totalorder %s36, 1
      %p258 = por %p256, %p257
      %p260 = scmp.ne.s32.totalorder %s243, %s259
      %p261 = scmp.eq.s32.totalorder %s36, 0
      %p262 = por %p260, %p261
      %s263 = ssub.s32 %s30, %s37
      %p264 = scmp.eq.s32.totalorder %s263, 0
      %s266 = sadd.s32 %s265, 1
      %s267 = scalar_select %p264, %s265, %s266
      %p270 = pneg %p264
      %p271 = scmp.eq.s32.totalorder %s30, 1
      %p272 = por %p270, %p271
      %p273 = scmp.ne.s32.totalorder %s265, %s268
      %p274 = scmp.eq.s32.totalorder %s30, 0
      %p275 = por %p273, %p274
      %p276 = scmp.ne.s32.totalorder %s265, %s268
      %p277 = scmp.eq.s32.totalorder %s35, 1
      %p278 = por %p276, %p277
      %p279 = scmp.ne.s32.totalorder %s268, %s269
      %p280 = scmp.eq.s32.totalorder %s35, 0
      %p281 = por %p279, %p280
      %p282 = scmp.ne.s32.totalorder %s268, %s269
      %p283 = scmp.eq.s32.totalorder %s36, 1
      %p284 = por %p282, %p283
      %p286 = scmp.ne.s32.totalorder %s269, %s285
      %p287 = scmp.eq.s32.totalorder %s36, 0
      %p288 = por %p286, %p287
      %s289 = ssub.s32 %s30, %s37
      %p290 = scmp.eq.s32.totalorder %s289, 0
      %s292 = sadd.s32 %s291, 1
      %s293 = scalar_select %p290, %s291, %s292
      %p296 = pneg %p290
      %p297 = scmp.eq.s32.totalorder %s30, 1
      %p298 = por %p296, %p297
      %p299 = scmp.ne.s32.totalorder %s291, %s294
      %p300 = scmp.eq.s32.totalorder %s30, 0
      %p301 = por %p299, %p300
      %p302 = scmp.ne.s32.totalorder %s291, %s294
      %p303 = scmp.eq.s32.totalorder %s35, 1
      %p304 = por %p302, %p303
      %p305 = scmp.ne.s32.totalorder %s294, %s295
      %p306 = scmp.eq.s32.totalorder %s35, 0
      %p307 = por %p305, %p306
      %p308 = scmp.ne.s32.totalorder %s294, %s295
      %p309 = scmp.eq.s32.totalorder %s36, 1
      %p310 = por %p308, %p309
      %p312 = scmp.ne.s32.totalorder %s295, %s311
      %p313 = scmp.eq.s32.totalorder %s36, 0
      %p314 = por %p312, %p313
      %s315 = ssub.s32 %s30, %s37
      %p316 = scmp.eq.s32.totalorder %s315, 0
      %s318 = sadd.s32 %s317, 1
      %s319 = scalar_select %p316, %s317, %s318
      %p322 = pneg %p316
      %p323 = scmp.eq.s32.totalorder %s30, 1
      %p324 = por %p322, %p323
      %p325 = scmp.ne.s32.totalorder %s317, %s320
      %p326 = scmp.eq.s32.totalorder %s30, 0
      %p327 = por %p325, %p326
      %p328 = scmp.ne.s32.totalorder %s317, %s320
      %p329 = scmp.eq.s32.totalorder %s35, 1
      %p330 = por %p328, %p329
      %p331 = scmp.ne.s32.totalorder %s320, %s321
      %p332 = scmp.eq.s32.totalorder %s35, 0
      %p333 = por %p331, %p332
      %p334 = scmp.ne.s32.totalorder %s320, %s321
      %p335 = scmp.eq.s32.totalorder %s36, 1
      %p336 = por %p334, %p335
      %p338 = scmp.ne.s32.totalorder %s321, %s337
      %p339 = scmp.eq.s32.totalorder %s36, 0
      %p340 = por %p338, %p339
      %s341 = ssub.s32 %s30, %s37
      %p342 = scmp.eq.s32.totalorder %s341, 0
      %s344 = sadd.s32 %s343, 1
      %s345 = scalar_select %p342, %s343, %s344
      %p348 = pneg %p342
      %p349 = scmp.eq.s32.totalorder %s30, 1
      %p350 = por %p348, %p349
      %p351 = scmp.ne.s32.totalorder %s343, %s346
      %p352 = scmp.eq.s32.totalorder %s30, 0
      %p353 = por %p351, %p352
      %p354 = scmp.ne.s32.totalorder %s343, %s346
      %p355 = scmp.eq.s32.totalorder %s35, 1
      %p356 = por %p354, %p355
      %p357 = scmp.ne.s32.totalorder %s346, %s347
      %p358 = scmp.eq.s32.totalorder %s35, 0
      %p359 = por %p357, %p358
      %p360 = scmp.ne.s32.totalorder %s346, %s347
      %p361 = scmp.eq.s32.totalorder %s36, 1
      %p362 = por %p360, %p361
      %p364 = scmp.ne.s32.totalorder %s347, %s363
      %p365 = scmp.eq.s32.totalorder %s36, 0
      %p366 = por %p364, %p365
      %s367 = ssub.s32 %s30, %s37
      %p368 = scmp.eq.s32.totalorder %s367, 0
      %s370 = sadd.s32 %s369, 1
      %s371 = scalar_select %p368, %s369, %s370
      %p374 = pneg %p368
      %p375 = scmp.eq.s32.totalorder %s30, 1
      %p376 = por %p374, %p375
      %p377 = scmp.ne.s32.totalorder %s369, %s372
      %p378 = scmp.eq.s32.totalorder %s30, 0
      %p379 = por %p377, %p378
      %p380 = scmp.ne.s32.totalorder %s369, %s372
      %p381 = scmp.eq.s32.totalorder %s35, 1
      %p382 = por %p380, %p381
      %p383 = scmp.ne.s32.totalorder %s372, %s373
      %p384 = scmp.eq.s32.totalorder %s35, 0
      %p385 = por %p383, %p384
      %p386 = scmp.ne.s32.totalorder %s372, %s373
      %p387 = scmp.eq.s32.totalorder %s36, 1
      %p388 = por %p386, %p387
      %p390 = scmp.ne.s32.totalorder %s373, %s389
      %p391 = scmp.eq.s32.totalorder %s36, 0
      %p392 = por %p390, %p391
      %s393 = ssub.s32 %s30, %s37
      %p394 = scmp.eq.s32.totalorder %s393, 0
      %s396 = sadd.s32 %s395, 1
      %s397 = scalar_select %p394, %s395, %s396
      %p400 = pneg %p394
      %p401 = scmp.eq.s32.totalorder %s30, 1
      %p402 = por %p400, %p401
      %p403 = scmp.ne.s32.totalorder %s395, %s398
      %p404 = scmp.eq.s32.totalorder %s30, 0
      %p405 = por %p403, %p404
      %p406 = scmp.ne.s32.totalorder %s395, %s398
      %p407 = scmp.eq.s32.totalorder %s35, 1
      %p408 = por %p406, %p407
      %p409 = scmp.ne.s32.totalorder %s398, %s399
      %p410 = scmp.eq.s32.totalorder %s35, 0
      %p411 = por %p409, %p410
      %p412 = scmp.ne.s32.totalorder %s398, %s399
      %p413 = scmp.eq.s32.totalorder %s36, 1
      %p414 = por %p412, %p413
      %p416 = scmp.ne.s32.totalorder %s399, %s415
      %p417 = scmp.eq.s32.totalorder %s36, 0
      %p418 = por %p416, %p417
      %s419 = ssub.s32 %s30, %s37
      %p420 = scmp.eq.s32.totalorder %s419, 0
      %s422 = sadd.s32 %s421, 1
      %s423 = scalar_select %p420, %s421, %s422
      %p426 = pneg %p420
      %p427 = scmp.eq.s32.totalorder %s30, 1
      %p428 = por %p426, %p427
      %p429 = scmp.ne.s32.totalorder %s421, %s424
      %p430 = scmp.eq.s32.totalorder %s30, 0
      %p431 = por %p429, %p430
      %p432 = scmp.ne.s32.totalorder %s421, %s424
      %p433 = scmp.eq.s32.totalorder %s35, 1
      %p434 = por %p432, %p433
      %p435 = scmp.ne.s32.totalorder %s424, %s425
      %p436 = scmp.eq.s32.totalorder %s35, 0
      %p437 = por %p435, %p436
      %p438 = scmp.ne.s32.totalorder %s424, %s425
      %p439 = scmp.eq.s32.totalorder %s36, 1
      %p440 = por %p438, %p439
      %p442 = scmp.ne.s32.totalorder %s425, %s441
      %p443 = scmp.eq.s32.totalorder %s36, 0
      %p444 = por %p442, %p443
      %s445 = ssub.s32 %s30, %s37
      %p446 = scmp.eq.s32.totalorder %s445, 0
      %s448 = sadd.s32 %s447, 1
      %s449 = scalar_select %p446, %s447, %s448
      %p452 = pneg %p446
      %p453 = scmp.eq.s32.totalorder %s30, 1
      %p454 = por %p452, %p453
      %p455 = scmp.ne.s32.totalorder %s447, %s450
      %p456 = scmp.eq.s32.totalorder %s30, 0
      %p457 = por %p455, %p456
      %p458 = scmp.ne.s32.totalorder %s447, %s450
      %p459 = scmp.eq.s32.totalorder %s35, 1
      %p460 = por %p458, %p459
      %p461 = scmp.ne.s32.totalorder %s450, %s451
      %p462 = scmp.eq.s32.totalorder %s35, 0
      %p463 = por %p461, %p462
      %p464 = scmp.ne.s32.totalorder %s450, %s451
      %p465 = scmp.eq.s32.totalorder %s36, 1
      %p466 = por %p464, %p465
      %p468 = scmp.ne.s32.totalorder %s451, %s467
      %p469 = scmp.eq.s32.totalorder %s36, 0
      %p470 = por %p468, %p469
      %s471 = ssub.s32 %s30, %s37
      %p472 = scmp.eq.s32.totalorder %s471, 0
      %s474 = sadd.s32 %s473, 1
      %s475 = scalar_select %p472, %s473, %s474
      %p478 = pneg %p472
      %p479 = scmp.eq.s32.totalorder %s30, 1
      %p480 = por %p478, %p479
      %p481 = scmp.ne.s32.totalorder %s473, %s476
      %p482 = scmp.eq.s32.totalorder %s30, 0
      %p483 = por %p481, %p482
      %p484 = scmp.ne.s32.totalorder %s473, %s476
      %p485 = scmp.eq.s32.totalorder %s35, 1
      %p486 = por %p484, %p485
      %p487 = scmp.ne.s32.totalorder %s476, %s477
      %p488 = scmp.eq.s32.totalorder %s35, 0
      %p489 = por %p487, %p488
      %p490 = scmp.ne.s32.totalorder %s476, %s477
      %p491 = scmp.eq.s32.totalorder %s36, 1
      %p492 = por %p490, %p491
      %p494 = scmp.ne.s32.totalorder %s477, %s493
      %p495 = scmp.eq.s32.totalorder %s36, 0
      %p496 = por %p494, %p495
      %s498 = sadd.s32 %s497, 1
      %p501 = scmp.eq.s32.totalorder %s30, 1
      %p502 = scmp.ne.s32.totalorder %s497, %s499
      %p503 = scmp.eq.s32.totalorder %s30, 0
      %p504 = por %p502, %p503
      %p505 = scmp.ne.s32.totalorder %s497, %s499
      %p506 = scmp.eq.s32.totalorder %s35, 1
      %p507 = por %p505, %p506
      %p508 = scmp.ne.s32.totalorder %s499, %s500
      %p509 = scmp.eq.s32.totalorder %s35, 0
      %p510 = por %p508, %p509
      %p511 = scmp.ne.s32.totalorder %s499, %s500
      %p512 = scmp.eq.s32.totalorder %s36, 1
      %p513 = por %p511, %p512
      %p515 = scmp.ne.s32.totalorder %s500, %s514
      %p516 = scmp.eq.s32.totalorder %s36, 0
      %p517 = por %p515, %p516
      %s519 = sadd.s32 %s518, 1
      %p522 = scmp.eq.s32.totalorder %s30, 1
      %p523 = scmp.ne.s32.totalorder %s518, %s520
      %p524 = scmp.eq.s32.totalorder %s30, 0
      %p525 = por %p523, %p524
      %p526 = scmp.ne.s32.totalorder %s518, %s520
      %p527 = scmp.eq.s32.totalorder %s35, 1
      %p528 = por %p526, %p527
      %p529 = scmp.ne.s32.totalorder %s520, %s521
      %p530 = scmp.eq.s32.totalorder %s35, 0
      %p531 = por %p529, %p530
      %p532 = scmp.ne.s32.totalorder %s520, %s521
      %p533 = scmp.eq.s32.totalorder %s36, 1
      %p534 = por %p532, %p533
      %p536 = scmp.ne.s32.totalorder %s521, %s535
      %p537 = scmp.eq.s32.totalorder %s36, 0
      %p538 = por %p536, %p537
      %s540 = sadd.s32 %s539, 1
      %p543 = scmp.eq.s32.totalorder %s30, 1
      %p544 = scmp.ne.s32.totalorder %s539, %s541
      %p545 = scmp.eq.s32.totalorder %s30, 0
      %p546 = por %p544, %p545
      %p547 = scmp.ne.s32.totalorder %s539, %s541
      %p548 = scmp.eq.s32.totalorder %s35, 1
      %p549 = por %p547, %p548
      %p550 = scmp.ne.s32.totalorder %s541, %s542
      %p551 = scmp.eq.s32.totalorder %s35, 0
      %p552 = por %p550, %p551
      %p553 = scmp.ne.s32.totalorder %s541, %s542
      %p554 = scmp.eq.s32.totalorder %s36, 1
      %p555 = por %p553, %p554
      %p557 = scmp.ne.s32.totalorder %s542, %s556
      %p558 = scmp.eq.s32.totalorder %s36, 0
      %p559 = por %p557, %p558
      %s561 = sadd.s32 %s560, 1
      %p564 = scmp.eq.s32.totalorder %s30, 1
      %p565 = scmp.ne.s32.totalorder %s560, %s562
      %p566 = scmp.eq.s32.totalorder %s30, 0
      %p567 = por %p565, %p566
      %p568 = scmp.ne.s32.totalorder %s560, %s562
      %p569 = scmp.eq.s32.totalorder %s35, 1
      %p570 = por %p568, %p569
      %p571 = scmp.ne.s32.totalorder %s562, %s563
      %p572 = scmp.eq.s32.totalorder %s35, 0
      %p573 = por %p571, %p572
      %p574 = scmp.ne.s32.totalorder %s562, %s563
      %p575 = scmp.eq.s32.totalorder %s36, 1
      %p576 = por %p574, %p575
      %p578 = scmp.ne.s32.totalorder %s563, %s577
      %p579 = scmp.eq.s32.totalorder %s36, 0
      %p580 = por %p578, %p579
      %s582 = sadd.s32 %s581, 1
      %p585 = scmp.eq.s32.totalorder %s30, 1
      %p586 = scmp.ne.s32.totalorder %s581, %s583
      %p587 = scmp.eq.s32.totalorder %s30, 0
      %p588 = por %p586, %p587
      %p589 = scmp.ne.s32.totalorder %s581, %s583
      %p590 = scmp.eq.s32.totalorder %s35, 1
      %p591 = por %p589, %p590
      %p592 = scmp.ne.s32.totalorder %s583, %s584
      %p593 = scmp.eq.s32.totalorder %s35, 0
      %p594 = por %p592, %p593
      %p595 = scmp.ne.s32.totalorder %s583, %s584
      %p596 = scmp.eq.s32.totalorder %s36, 1
      %p597 = por %p595, %p596
      %p599 = scmp.ne.s32.totalorder %s584, %s598
      %p600 = scmp.eq.s32.totalorder %s36, 0
      %p601 = por %p599, %p600
      %p602 = scmp.le.s32.totalorder 1, %s30
      %p603 = scmp.lt.s32.totalorder %s30, 3
      %p604 = pnand %p602, %p603
      %p605 = pneg %p604
      // Predicated region
      $region9: #{custom_bert_forward.1} parent=5 // pred_check
        _
      $region10: #{custom_bert_forward.1} parent=5 // pred_check_branch
        %607 = sbr.rel (%p604) target = $region12
      $region11: #{custom_bert_forward.1} parent=5 // pred_region
        %s608 = ssub.s32 %s30, 1
        // Predicated region
        $region13: #{custom_bert_forward.1} parent=11 // pred_check
          %p609 = pneg %p51
        $region14: #{custom_bert_forward.1} parent=11 // pred_check_branch
          %611 = sbr.rel (%p609) target = $region16
        $region15: #{custom_bert_forward.1} parent=11 // pred_region
          _
        $region16: #{custom_bert_forward.1} parent=11 // pred_fallthru
          _
        // Predicated region
        $region17: #{custom_bert_forward.1} parent=11 // pred_check
          %p612 = pneg %p72
        $region18: #{custom_bert_forward.1} parent=11 // pred_check_branch
          %614 = sbr.rel (%p612) target = $region20
        $region19: #{custom_bert_forward.1} parent=11 // pred_region
          _
        $region20: #{custom_bert_forward.1} parent=11 // pred_fallthru
          _
        // Predicated region
        $region21: #{custom_bert_forward.1} parent=11 // pred_check
          %p615 = pneg %p93
        $region22: #{custom_bert_forward.1} parent=11 // pred_check_branch
          %617 = sbr.rel (%p615) target = $region24
        $region23: #{custom_bert_forward.1} parent=11 // pred_region
          _
        $region24: #{custom_bert_forward.1} parent=11 // pred_fallthru
          _
        // Predicated region
        $region25: #{custom_bert_forward.1} parent=11 // pred_check
          %p618 = pneg %p114
        $region26: #{custom_bert_forward.1} parent=11 // pred_check_branch
          %620 = sbr.rel (%p618) target = $region28
        $region27: #{custom_bert_forward.1} parent=11 // pred_region
          _
        $region28: #{custom_bert_forward.1} parent=11 // pred_fallthru
          _
        // Predicated region
        $region29: #{custom_bert_forward.1} parent=11 // pred_check
          %p621 = pneg %p135
        $region30: #{custom_bert_forward.1} parent=11 // pred_check_branch
          %623 = sbr.rel (%p621) target = $region32
        $region31: #{custom_bert_forward.1} parent=11 // pred_region
          _
        $region32: #{custom_bert_forward.1} parent=11 // pred_fallthru
          _
        // Predicated region
        $region33: #{custom_bert_forward.1} parent=11 // pred_check
          %p624 = pneg %p156
        $region34: #{custom_bert_forward.1} parent=11 // pred_check_branch
          %626 = sbr.rel (%p624) target = $region36
        $region35: #{custom_bert_forward.1} parent=11 // pred_region
          _
        $region36: #{custom_bert_forward.1} parent=11 // pred_fallthru
          _
        // Predicated region
        $region37: #{custom_bert_forward.1} parent=11 // pred_check
          %p627 = pneg %p177
        $region38: #{custom_bert_forward.1} parent=11 // pred_check_branch
          %629 = sbr.rel (%p627) target = $region40
        $region39: #{custom_bert_forward.1} parent=11 // pred_region
          _
        $region40: #{custom_bert_forward.1} parent=11 // pred_fallthru
          _
        // Predicated region
        $region41: #{custom_bert_forward.1} parent=11 // pred_check
          %p630 = pneg %p510
        $region42: #{custom_bert_forward.1} parent=11 // pred_check_branch
          %632 = sbr.rel (%p630) target = $region44
        $region43: #{custom_bert_forward.1} parent=11 // pred_region
          _
        $region44: #{custom_bert_forward.1} parent=11 // pred_fallthru
          _
        // Predicated region
        $region45: #{custom_bert_forward.1} parent=11 // pred_check
          %p633 = pneg %p531
        $region46: #{custom_bert_forward.1} parent=11 // pred_check_branch
          %635 = sbr.rel (%p633) target = $region48
        $region47: #{custom_bert_forward.1} parent=11 // pred_region
          _
        $region48: #{custom_bert_forward.1} parent=11 // pred_fallthru
          _
        // Predicated region
        $region49: #{custom_bert_forward.1} parent=11 // pred_check
          %p636 = pneg %p552
        $region50: #{custom_bert_forward.1} parent=11 // pred_check_branch
          %638 = sbr.rel (%p636) target = $region52
        $region51: #{custom_bert_forward.1} parent=11 // pred_region
          _
        $region52: #{custom_bert_forward.1} parent=11 // pred_fallthru
          _
        // Predicated region
        $region53: #{custom_bert_forward.1} parent=11 // pred_check
          %p639 = pneg %p573
        $region54: #{custom_bert_forward.1} parent=11 // pred_check_branch
          %641 = sbr.rel (%p639) target = $region56
        $region55: #{custom_bert_forward.1} parent=11 // pred_region
          _
        $region56: #{custom_bert_forward.1} parent=11 // pred_fallthru
          _
      $region12: #{custom_bert_forward.1} parent=5 // pred_fallthru
        _
      %p642 = scmp.lt.s32.totalorder %s30, 2
      // Predicated region
      $region57: #{custom_bert_forward.1} parent=5 // pred_check
        %p643 = pneg %p642
      $region58: #{custom_bert_forward.1} parent=5 // pred_check_branch
        %645 = sbr.rel (%p643) target = $region60
      $region59: #{custom_bert_forward.1} parent=5 // pred_region
        // Predicated region
        $region61: #{custom_bert_forward.1} parent=59 // pred_check
          %p646 = pneg %p197
        $region62: #{custom_bert_forward.1} parent=59 // pred_check_branch
          %648 = sbr.rel (%p646) target = $region64
        $region63: #{custom_bert_forward.1} parent=59 // pred_region
          %p649 = scmp.lt.s32.totalorder %s30, 1
          %s650 = scalar_select %p649, %s30, 1
          %s651 = smul.addr %s650, 4
          %s652 = smul.addr %s651, 4
          %s653 = scalar_lea.vmem %s7, %s652
        $region64: #{custom_bert_forward.1} parent=59 // pred_fallthru
          _
        // Predicated region
        $region65: #{custom_bert_forward.1} parent=59 // pred_check
          %p654 = pneg %p223
        $region66: #{custom_bert_forward.1} parent=59 // pred_check_branch
          %656 = sbr.rel (%p654) target = $region68
        $region67: #{custom_bert_forward.1} parent=59 // pred_region
          %p657 = scmp.lt.s32.totalorder %s30, 1
          %s658 = scalar_select %p657, %s30, 1
          %s659 = scalar_lea.vmem %s8, %s658
        $region68: #{custom_bert_forward.1} parent=59 // pred_fallthru
          _
        // Predicated region
        $region69: #{custom_bert_forward.1} parent=59 // pred_check
          %p660 = pneg %p249
        $region70: #{custom_bert_forward.1} parent=59 // pred_check_branch
          %662 = sbr.rel (%p660) target = $region72
        $region71: #{custom_bert_forward.1} parent=59 // pred_region
          %p663 = scmp.lt.s32.totalorder %s30, 1
          %s664 = scalar_select %p663, %s30, 1
          %s665 = smul.addr %s664, 4
          %s666 = smul.addr %s665, 4
          %s667 = scalar_lea.vmem %s9, %s666
        $region72: #{custom_bert_forward.1} parent=59 // pred_fallthru
          _
        // Predicated region
        $region73: #{custom_bert_forward.1} parent=59 // pred_check
          %p668 = pneg %p275
        $region74: #{custom_bert_forward.1} parent=59 // pred_check_branch
          %670 = sbr.rel (%p668) target = $region76
        $region75: #{custom_bert_forward.1} parent=59 // pred_region
          %p671 = scmp.lt.s32.totalorder %s30, 1
          %s672 = scalar_select %p671, %s30, 1
          %s673 = scalar_lea.vmem %s10, %s672
        $region76: #{custom_bert_forward.1} parent=59 // pred_fallthru
          _
        // Predicated region
        $region77: #{custom_bert_forward.1} parent=59 // pred_check
          %p674 = pneg %p301
        $region78: #{custom_bert_forward.1} parent=59 // pred_check_branch
          %676 = sbr.rel (%p674) target = $region80
        $region79: #{custom_bert_forward.1} parent=59 // pred_region
          %p677 = scmp.lt.s32.totalorder %s30, 1
          %s678 = scalar_select %p677, %s30, 1
          %s679 = scalar_lea.vmem %s11, %s678
        $region80: #{custom_bert_forward.1} parent=59 // pred_fallthru
          _
        // Predicated region
        $region81: #{custom_bert_forward.1} parent=59 // pred_check
          %p680 = pneg %p327
        $region82: #{custom_bert_forward.1} parent=59 // pred_check_branch
          %682 = sbr.rel (%p680) target = $region84
        $region83: #{custom_bert_forward.1} parent=59 // pred_region
          %p683 = scmp.lt.s32.totalorder %s30, 1
          %s684 = scalar_select %p683, %s30, 1
          %s685 = scalar_lea.vmem %s12, %s684
        $region84: #{custom_bert_forward.1} parent=59 // pred_fallthru
          _
        // Predicated region
        $region85: #{custom_bert_forward.1} parent=59 // pred_check
          %p686 = pneg %p353
        $region86: #{custom_bert_forward.1} parent=59 // pred_check_branch
          %688 = sbr.rel (%p686) target = $region88
        $region87: #{custom_bert_forward.1} parent=59 // pred_region
          %p689 = scmp.lt.s32.totalorder %s30, 1
          %s690 = scalar_select %p689, %s30, 1
          %s691 = smul.addr %s690, 4
          %s692 = smul.addr %s691, 4
          %s693 = scalar_lea.vmem %s13, %s692
        $region88: #{custom_bert_forward.1} parent=59 // pred_fallthru
          _
        // Predicated region
        $region89: #{custom_bert_forward.1} parent=59 // pred_check
          %p694 = pneg %p379
        $region90: #{custom_bert_forward.1} parent=59 // pred_check_branch
          %696 = sbr.rel (%p694) target = $region92
        $region91: #{custom_bert_forward.1} parent=59 // pred_region
          %p697 = scmp.lt.s32.totalorder %s30, 1
          %s698 = scalar_select %p697, %s30, 1
          %s699 = scalar_lea.vmem %s14, %s698
        $region92: #{custom_bert_forward.1} parent=59 // pred_fallthru
          _
        // Predicated region
        $region93: #{custom_bert_forward.1} parent=59 // pred_check
          %p700 = pneg %p405
        $region94: #{custom_bert_forward.1} parent=59 // pred_check_branch
          %702 = sbr.rel (%p700) target = $region96
        $region95: #{custom_bert_forward.1} parent=59 // pred_region
          %p703 = scmp.lt.s32.totalorder %s30, 1
          %s704 = scalar_select %p703, %s30, 1
          %s705 = smul.addr %s704, 8
          %s706 = smul.addr %s705, 4
          %s707 = scalar_lea.vmem %s15, %s706
        $region96: #{custom_bert_forward.1} parent=59 // pred_fallthru
          _
        // Predicated region
        $region97: #{custom_bert_forward.1} parent=59 // pred_check
          %p708 = pneg %p431
        $region98: #{custom_bert_forward.1} parent=59 // pred_check_branch
          %710 = sbr.rel (%p708) target = $region100
        $region99: #{custom_bert_forward.1} parent=59 // pred_region
          %p711 = scmp.lt.s32.totalorder %s30, 1
          %s712 = scalar_select %p711, %s30, 1
          %s713 = scalar_lea.vmem %s16, %s712
        $region100: #{custom_bert_forward.1} parent=59 // pred_fallthru
          _
        // Predicated region
        $region101: #{custom_bert_forward.1} parent=59 // pred_check
          %p714 = pneg %p457
        $region102: #{custom_bert_forward.1} parent=59 // pred_check_branch
          %716 = sbr.rel (%p714) target = $region104
        $region103: #{custom_bert_forward.1} parent=59 // pred_region
          %p717 = scmp.lt.s32.totalorder %s30, 1
          %s718 = scalar_select %p717, %s30, 1
          %s719 = scalar_lea.vmem %s17, %s718
        $region104: #{custom_bert_forward.1} parent=59 // pred_fallthru
          _
        // Predicated region
        $region105: #{custom_bert_forward.1} parent=59 // pred_check
          %p720 = pneg %p483
        $region106: #{custom_bert_forward.1} parent=59 // pred_check_branch
          %722 = sbr.rel (%p720) target = $region108
        $region107: #{custom_bert_forward.1} parent=59 // pred_region
          %p723 = scmp.lt.s32.totalorder %s30, 1
          %s724 = scalar_select %p723, %s30, 1
          %s725 = scalar_lea.vmem %s18, %s724
        $region108: #{custom_bert_forward.1} parent=59 // pred_fallthru
          _
      $region60: #{custom_bert_forward.1} parent=5 // pred_fallthru
        _
      %p726 = scmp.le.s32.totalorder 1, %s30
      %p727 = scmp.lt.s32.totalorder %s30, 3
      %p728 = pnand %p726, %p727
      %p729 = pneg %p728
      // Predicated region
      $region109: #{custom_bert_forward.1} parent=5 // pred_check
        _
      $region110: #{custom_bert_forward.1} parent=5 // pred_check_branch
        %731 = sbr.rel (%p728) target = $region112
      $region111: #{custom_bert_forward.1} parent=5 // pred_region
        %s732 = ssub.s32 %s30, 1
        %p733 = pneg %p51
        %p734 = pneg %p48
        %p735 = pneg %p72
        %p736 = pneg %p69
        %p737 = pneg %p93
        %p738 = pneg %p90
        %p739 = pneg %p114
        %p740 = pneg %p111
        %p741 = pneg %p135
        %p742 = pneg %p132
        %p743 = pneg %p156
        %p744 = pneg %p153
        %p745 = pneg %p177
        %p746 = pneg %p174
        %p747 = scmp.lt.s32.totalorder %s35, 1
        %s748 = scalar_select %p747, %s35, 1
        %s749 = smul.addr %s748, 4
        %s750 = smul.addr %s749, 4
        %s751 = scalar_lea.vmem %s7, %s750
        %p752 = pneg %p203
        %p753 = pneg %p200
        %p754 = scmp.lt.s32.totalorder %s35, 1
        %s755 = scalar_select %p754, %s35, 1
        %s756 = scalar_lea.vmem %s8, %s755
        %p757 = pneg %p229
        %p758 = pneg %p226
        %p759 = scmp.lt.s32.totalorder %s35, 1
        %s760 = scalar_select %p759, %s35, 1
        %s761 = smul.addr %s760, 4
        %s762 = smul.addr %s761, 4
        %s763 = scalar_lea.vmem %s9, %s762
        %p764 = pneg %p255
        %p765 = pneg %p252
        %p766 = scmp.lt.s32.totalorder %s35, 1
        %s767 = scalar_select %p766, %s35, 1
        %s768 = scalar_lea.vmem %s10, %s767
        %p769 = pneg %p281
        %p770 = pneg %p278
        %p771 = scmp.lt.s32.totalorder %s35, 1
        %s772 = scalar_select %p771, %s35, 1
        %s773 = scalar_lea.vmem %s11, %s772
        %p774 = pneg %p307
        %p775 = pneg %p304
        %p776 = scmp.lt.s32.totalorder %s35, 1
        %s777 = scalar_select %p776, %s35, 1
        %s778 = scalar_lea.vmem %s12, %s777
        %p779 = pneg %p333
        %p780 = pneg %p330
        %p781 = scmp.lt.s32.totalorder %s35, 1
        %s782 = scalar_select %p781, %s35, 1
        %s783 = smul.addr %s782, 4
        %s784 = smul.addr %s783, 4
        %s785 = scalar_lea.vmem %s13, %s784
        %p786 = pneg %p359
        %p787 = pneg %p356
        %p788 = scmp.lt.s32.totalorder %s35, 1
        %s789 = scalar_select %p788, %s35, 1
        %s790 = scalar_lea.vmem %s14, %s789
        %p791 = pneg %p385
        %p792 = pneg %p382
        %p793 = scmp.lt.s32.totalorder %s35, 1
        %s794 = scalar_select %p793, %s35, 1
        %s795 = smul.addr %s794, 8
        %s796 = smul.addr %s795, 4
        %s797 = scalar_lea.vmem %s15, %s796
        %p798 = pneg %p411
        %p799 = pneg %p408
        %p800 = scmp.lt.s32.totalorder %s35, 1
        %s801 = scalar_select %p800, %s35, 1
        %s802 = scalar_lea.vmem %s16, %s801
        %p803 = pneg %p437
        %p804 = pneg %p434
        %p805 = scmp.lt.s32.totalorder %s35, 1
        %s806 = scalar_select %p805, %s35, 1
        %s807 = scalar_lea.vmem %s17, %s806
        %p808 = pneg %p463
        %p809 = pneg %p460
        %p810 = scmp.lt.s32.totalorder %s35, 1
        %s811 = scalar_select %p810, %s35, 1
        %s812 = scalar_lea.vmem %s18, %s811
        %p813 = pneg %p489
        %p814 = pneg %p486
        %p815 = pneg %p510
        %p816 = pneg %p507
        %p817 = pneg %p531
        %p818 = pneg %p528
        %p819 = pneg %p552
        %p820 = pneg %p549
        %p821 = pneg %p573
        %p822 = pneg %p570
        %p823 = pneg %p594
        %p824 = pneg %p591
        %p825 = scmp.lt.s32.totalorder %s35, 1
        %s826 = scalar_select %p825, %s35, 1
        %s827 = smul.addr %s826, 4
        %s828 = smul.addr %s827, 4
        %s829 = scalar_lea.vmem %s7, %s828
        %p830 = scmp.lt.s32.totalorder %s35, 1
        %s831 = scalar_select %p830, %s35, 1
        %s832 = scalar_lea.vmem %s8, %s831
        %p833 = scmp.lt.s32.totalorder %s35, 1
        %s834 = scalar_select %p833, %s35, 1
        %s835 = smul.addr %s834, 4
        %s836 = smul.addr %s835, 4
        %s837 = scalar_lea.vmem %s9, %s836
        %p838 = scmp.lt.s32.totalorder %s35, 1
        %s839 = scalar_select %p838, %s35, 1
        %s840 = scalar_lea.vmem %s10, %s839
        %p841 = scmp.lt.s32.totalorder %s35, 1
        %s842 = scalar_select %p841, %s35, 1
        %s843 = scalar_lea.vmem %s11, %s842
        %p844 = scmp.lt.s32.totalorder %s35, 1
        %s845 = scalar_select %p844, %s35, 1
        %s846 = scalar_lea.vmem %s12, %s845
        %p847 = scmp.lt.s32.totalorder %s35, 1
        %s848 = scalar_select %p847, %s35, 1
        %s849 = smul.addr %s848, 4
        %s850 = smul.addr %s849, 4
        %s851 = scalar_lea.vmem %s13, %s850
        %p852 = scmp.lt.s32.totalorder %s35, 1
        %s853 = scalar_select %p852, %s35, 1
        %s854 = scalar_lea.vmem %s14, %s853
        %p855 = scmp.lt.s32.totalorder %s35, 1
        %s856 = scalar_select %p855, %s35, 1
        %s857 = smul.addr %s856, 8
        %s858 = smul.addr %s857, 4
        %s859 = scalar_lea.vmem %s15, %s858
        %p860 = scmp.lt.s32.totalorder %s35, 1
        %s861 = scalar_select %p860, %s35, 1
        %s862 = scalar_lea.vmem %s16, %s861
        %p863 = scmp.lt.s32.totalorder %s35, 1
        %s864 = scalar_select %p863, %s35, 1
        %s865 = scalar_lea.vmem %s17, %s864
        %p866 = scmp.lt.s32.totalorder %s35, 1
        %s867 = scalar_select %p866, %s35, 1
        %s868 = scalar_lea.vmem %s18, %s867
        %p870 = scmp.eq.s32.totalorder %s35, 0
        // Predicated region
        $region113: #{custom_bert_forward.1} parent=111 // pred_check
          %p871 = pneg %p870
        $region114: #{custom_bert_forward.1} parent=111 // pred_check_branch
          %873 = sbr.rel (%p871) target = $region116
        $region115: #{custom_bert_forward.1} parent=111 // pred_region
          %v874 = vld [vmem:[%s0] sm:$0xff]
          %v875 = vld [vmem:[%s0 + $0x8] sm:$0xff]
          %v876 = vlaneseq
          %v877 = vand.u32 %v876, 127
          %878 = vset.pattern.permute.xlu0 0
          %879 = vperm.xlu0 %878, %v874
          %v880 = vpop.permute.xlu0 %879
          %881 = vset.pattern.permute.xlu0 0
          %882 = vperm.xlu0 %881, %v875
          %v883 = vpop.permute.xlu0 %882
          %vm884 = vcmp.eq.s32.totalorder %v880, %v877
          %vm885 = vcmp.eq.s32.totalorder %v883, %v877
          %v886 = vsel %vm884, 1.0, 0.0
          %v887 = vsel %vm885, 1.0, 0.0
          %v888 = vpack.c.bf16 %v887, %v886
          %v889 = vld [vmem:[%s2] sm:$0xf]
          %v890 = vld [vmem:[%s2 + $0x4] sm:$0xf]
          %v891 = vld [vmem:[%s2 + $0x8] sm:$0xf]
          %v892 = vld [vmem:[%s2 + $0xc] sm:$0xf]
          %v893 = vld [vmem:[%s2 + $0x10] sm:$0xf]
          %v894 = vld [vmem:[%s2 + $0x14] sm:$0xf]
          %v895 = vld [vmem:[%s2 + $0x18] sm:$0xf]
          %v896 = vld [vmem:[%s2 + $0x1c] sm:$0xf]
          %v897 = vld [vmem:[%s2 + $0x20] sm:$0xf]
          %v898 = vld [vmem:[%s2 + $0x24] sm:$0xf]
          %v899 = vld [vmem:[%s2 + $0x28] sm:$0xf]
          %v900 = vld [vmem:[%s2 + $0x2c] sm:$0xf]
          %v901 = vld [vmem:[%s2 + $0x30] sm:$0xf]
          %v902 = vld [vmem:[%s2 + $0x34] sm:$0xf]
          %v903 = vld [vmem:[%s2 + $0x38] sm:$0xf]
          %v904 = vld [vmem:[%s2 + $0x3c] sm:$0xf]
          %v905 = vld [vmem:[%s3] sm:$0xff]
          %v906 = vld [vmem:[%s4] sm:$0x1]
          %v923 = vunpack.c.l.b16 %v889
          %v924 = vunpack.c.l.b16 %v890
          %v925 = vunpack.c.l.b16 %v891
          %v926 = vunpack.c.l.b16 %v892
          %v927 = vunpack.c.l.b16 %v893
          %v928 = vunpack.c.l.b16 %v894
          %v929 = vunpack.c.l.b16 %v895
          %v930 = vunpack.c.l.b16 %v896
          %v931 = vunpack.c.l.b16 %v897
          %v932 = vunpack.c.l.b16 %v898
          %v933 = vunpack.c.l.b16 %v899
          %v934 = vunpack.c.l.b16 %v900
          %v935 = vunpack.c.l.b16 %v901
          %v936 = vunpack.c.l.b16 %v902
          %v937 = vunpack.c.l.b16 %v903
          %v938 = vunpack.c.l.b16 %v904
          %v939 = vpack.c.b16 %v924, %v923
          %v940 = vpack.c.b16 %v926, %v925
          %v941 = vpack.c.b16 %v928, %v927
          %v942 = vpack.c.b16 %v930, %v929
          %v943 = vpack.c.b16 %v932, %v931
          %v944 = vpack.c.b16 %v934, %v933
          %v945 = vpack.c.b16 %v936, %v935
          %v946 = vpack.c.b16 %v938, %v937
          %955 = vmatpush.bf16.msra.mxu0 %v946
          %956 = vmatpush.bf16.msra.mxu0 %v945
          %957 = vmatpush.bf16.msra.mxu0 %v944
          %958 = vmatpush.bf16.msra.mxu0 %v943
          %959 = vmatpush.bf16.msra.mxu0 %v942
          %960 = vmatpush.bf16.msra.mxu0 %v941
          %961 = vmatpush.bf16.msra.mxu0 %v940
          %962 = vmatpush.bf16.msra.mxu0 %v939
          %963 = vmatmul.bf16.gmra.mxu0 %v888
          %v964 = vpop.f32.mrf.mxu0
          %v965 = vadd.f32 %v905, %v964
          %v966 = vpop.f32.mrf.mxu0
          %v967 = vadd.f32 %v905, %v966
          %968 = vdwg.mxu0
          %v969 = vperm.slane %v906, 0
          %v970 = vadd.f32 %v965, %v969
          %v971 = vadd.f32 %v967, %v969
          %v972 = vld [vmem:[%s5] sm:$0x1]
          %v973 = vld [vmem:[%s6] sm:$0x1]
          %vm974 = vcmask 261120
          %v975 = vsel %vm974, %v970, 0.0
          %976 = vadd.xlane.f32.xlu0 %v975
          %v977 = vpop.xlane.xlu0 %976
          %v978 = vsel %vm974, %v971, 0.0
          %979 = vadd.xlane.f32.xlu0 %v978
          %v980 = vpop.xlane.xlu0 %979
          %v981 = vrcp.pop 32.0
          %v982 = vmul.f32 32.0, %v981
          %v983 = vsub.f32 1.0, %v982
          %v984 = vmul.f32 %v981, %v983
          %v985 = vadd.f32 %v981, %v984
          %vm986 = vweird.f32 %v981
          %v987 = vsel %vm986, %v981, %v985
          %v988 = vmul.f32 %v977, %v987
          %v989 = vmul.f32 %v980, %v987
          %v990 = vsub.f32 %v970, %v988
          %v991 = vsub.f32 %v971, %v989
          %v992 = vmul.f32 %v990, %v990
          %v993 = vmul.f32 %v991, %v991
          %v994 = vsel %vm974, %v992, 0.0
          %995 = vadd.xlane.f32.xlu0 %v994
          %v996 = vpop.xlane.xlu0 %995
          %v997 = vsel %vm974, %v993, 0.0
          %998 = vadd.xlane.f32.xlu0 %v997
          %v999 = vpop.xlane.xlu0 %998
          %v1000 = vmul.f32 %v996, %v987
          %v1001 = vmul.f32 %v999, %v987
          %v1002 = vadd.f32 %v1000, 1e-12
          %v1003 = vadd.f32 %v1001, 1e-12
          %v1004 = vrsqrt.pop %v1002
          %v1005 = vmul.f32 %v1004, %v1002
          %v1006 = vmul.f32 %v1005, %v1004
          %v1007 = vmul.f32 0.5, %v1006
          %v1008 = vsub.f32 1.5, %v1007
          %v1009 = vmul.f32 %v1004, %v1008
          %vm1010 = vweird.f32 %v1002
          %vm1011 = vweird.f32 %v1004
          %vm1012 = vmor %vm1010, %vm1011
          %v1013 = vsel %vm1012, %v1004, %v1009
          %v1014 = vrsqrt.pop %v1003
          %v1015 = vmul.f32 %v1014, %v1003
          %v1016 = vmul.f32 %v1015, %v1014
          %v1017 = vmul.f32 0.5, %v1016
          %v1018 = vsub.f32 1.5, %v1017
          %v1019 = vmul.f32 %v1014, %v1018
          %vm1020 = vweird.f32 %v1003
          %vm1021 = vweird.f32 %v1014
          %vm1022 = vmor %vm1020, %vm1021
          %v1023 = vsel %vm1022, %v1014, %v1019
          %v1024 = vmul.f32 %v990, %v1013
          %v1025 = vmul.f32 %v991, %v1023
          %v1027 = vperm.slane %v972, 0
          %v1029 = vmul.f32 %v1024, %v1027
          %v1030 = vmul.f32 %v1025, %v1027
          %v1032 = vperm.slane %v973, 0
          %v1034 = vadd.f32 %v1029, %v1032
          %v1035 = vadd.f32 %v1030, %v1032
          %1036 = vst.msk [vmem:[#allocation2] sm:$0xff] %vm974, %v1034
          %1037 = vst.msk [vmem:[#allocation2 + $0x8] sm:$0xff] %vm974, %v1035
        $region116: #{custom_bert_forward.1} parent=111 // pred_fallthru
          _
        %v1038 = vld [vmem:[#allocation2] sm:$0xff]
        %v1039 = vld [vmem:[#allocation2 + $0x8] sm:$0xff]
        %v1040 = vld [vmem:[%s1] sm:$0xff]
        %v1041 = vld [vmem:[%s1 + $0x8] sm:$0xff]
        %v1042 = vpack.c.bf16 %v1039, %v1038
        %v1043 = vld [vmem:[%s829] sm:$0xf]
        %v1044 = vld [vmem:[%s829 + $0x4] sm:$0xf]
        %v1045 = vld [vmem:[%s829 + $0x8] sm:$0xf]
        %v1046 = vld [vmem:[%s829 + $0xc] sm:$0xf]
        %v1047 = vld [vmem:[%s832] sm:$0x1]
        %v1049 = vperm.slane %v1047, 0
        %v1055 = vunpack.c.l.b16 %v1043
        %v1056 = vunpack.c.l.b16 %v1044
        %v1057 = vunpack.c.l.b16 %v1045
        %v1058 = vunpack.c.l.b16 %v1046
        %v1059 = vpack.c.b16 %v1056, %v1055
        %v1060 = vpack.c.b16 %v1058, %v1057
        %vm1063 = vcmask 261120
        %v1065 = vsel %vm1063, %v1042, 0
        %1067 = vmatpush.bf16.msra.mxu0 0
        %1068 = vmatpush.bf16.msra.mxu0 0
        %1069 = vmatpush.bf16.msra.mxu0 0
        %1070 = vmatpush.bf16.msra.mxu0 0
        %1071 = vmatpush.bf16.msra.mxu0 0
        %1072 = vmatpush.bf16.msra.mxu0 0
        %1073 = vmatpush.bf16.msra.mxu0 %v1060
        %1074 = vmatpush.bf16.msra.mxu0 %v1059
        %1075 = vmatmul.bf16.gmra.mxu0 %v1065
        %v1076 = vpop.f32.mrf.mxu0
        %v1077 = vadd.f32 %v1049, %v1076
        %v1078 = vpop.f32.mrf.mxu0
        %v1079 = vadd.f32 %v1049, %v1078
        %1080 = vdwg.mxu0
        %v1081 = vpack.c.bf16 %v1079, %v1077
        %1083 = vrot.lane.b32.xlu0 %v1081, 96
        %v1084 = vpop.permute.xlu0 %1083
        %vm1085 = vcmask 64512
        %v1087 = vsel %vm1085, %v1081, 0
        %v1090 = vsel %vm1085, %v1084, 0
        %1092 = vmatpush.bf16.xpose.msra.mxu0 0
        %1093 = vmatpush.bf16.xpose.msra.mxu0 0
        %1094 = vmatpush.bf16.xpose.msra.mxu0 0
        %1095 = vmatpush.bf16.xpose.msra.mxu0 0
        %1096 = vmatpush.bf16.xpose.msra.mxu0 0
        %1097 = vmatpush.bf16.xpose.msra.mxu0 0
        %1098 = vmatpush.bf16.xpose.msra.mxu0 0
        %1099 = vmatpush.bf16.xpose.msra.mxu0 %v1090
        %1100 = vmatmul.bf16.gmra.mxu0 %v1087
        %v1101 = vpop.f32.mrf.mxu0
        %v1102 = vadd.f32 0.0, %v1101
        %v1103 = vpop.f32.mrf.mxu0
        %v1104 = vadd.f32 0.0, %v1103
        %1105 = vdwg.mxu0
        %v1106 = vmul.f32 %v1102, 0.35355338
        %v1107 = vmul.f32 %v1104, 0.35355338
        %v1108 = vadd.f32 %v1106, %v1040
        %v1109 = vadd.f32 %v1107, %v1041
        %v1110 = vmul.f32 %v1108, 1.442695
        %v1111 = vpow.pop %v1110
        %v1112 = vmul.f32 %v1109, 1.442695
        %v1113 = vpow.pop %v1112
        %vm1114 = vcmask 130048
        %v1115 = vsel %vm1114, %v1111, 0.0
        %1116 = vadd.xlane.f32.xlu0 %v1115
        %v1117 = vpop.xlane.xlu0 %1116
        %v1118 = vsel %vm1114, %v1113, 0.0
        %1119 = vadd.xlane.f32.xlu0 %v1118
        %v1120 = vpop.xlane.xlu0 %1119
        %v1121 = vrcp.pop %v1117
        %v1122 = vrcp.pop %v1120
        %v1123 = vmul.f32 %v1111, %v1121
        %v1124 = vmul.f32 %v1113, %v1122
        %v1125 = vpack.c.bf16 %v1124, %v1123
        %1126 = vrot.lane.b32.xlu0 %v1081, 64
        %v1127 = vpop.permute.xlu0 %1126
        %v1130 = vsel %vm1114, %v1125, 0
        %1132 = vmatpush.bf16.msra.mxu0 0
        %1133 = vmatpush.bf16.msra.mxu0 0
        %1134 = vmatpush.bf16.msra.mxu0 0
        %1135 = vmatpush.bf16.msra.mxu0 0
        %1136 = vmatpush.bf16.msra.mxu0 0
        %1137 = vmatpush.bf16.msra.mxu0 0
        %1138 = vmatpush.bf16.msra.mxu0 0
        %1139 = vmatpush.bf16.msra.mxu0 %v1127
        %1140 = vmatmul.bf16.gmra.mxu0 %v1130
        %v1141 = vpop.f32.mrf.mxu0
        %v1142 = vadd.f32 0.0, %v1141
        %v1143 = vpop.f32.mrf.mxu0
        %v1144 = vadd.f32 0.0, %v1143
        %1145 = vdwg.mxu0
        %1146 = vrot.lane.b32.xlu0 %v1081, 120
        %v1147 = vpop.permute.xlu0 %1146
        %1148 = vrot.lane.b32.xlu0 %v1081, 88
        %v1149 = vpop.permute.xlu0 %1148
        %v1151 = vsel %vm1085, %v1147, 0
        %v1154 = vsel %vm1085, %v1149, 0
        %1156 = vmatpush.bf16.xpose.msra.mxu0 0
        %1157 = vmatpush.bf16.xpose.msra.mxu0 0
        %1158 = vmatpush.bf16.xpose.msra.mxu0 0
        %1159 = vmatpush.bf16.xpose.msra.mxu0 0
        %1160 = vmatpush.bf16.xpose.msra.mxu0 0
        %1161 = vmatpush.bf16.xpose.msra.mxu0 0
        %1162 = vmatpush.bf16.xpose.msra.mxu0 0
        %1163 = vmatpush.bf16.xpose.msra.mxu0 %v1154
        %1164 = vmatmul.bf16.gmra.mxu0 %v1151
        %v1165 = vpop.f32.mrf.mxu0
        %v1166 = vadd.f32 0.0, %v1165
        %v1167 = vpop.f32.mrf.mxu0
        %v1168 = vadd.f32 0.0, %v1167
        %1169 = vdwg.mxu0
        %v1170 = vmul.f32 %v1166, 0.35355338
        %v1171 = vmul.f32 %v1168, 0.35355338
        %v1172 = vadd.f32 %v1170, %v1040
        %v1173 = vadd.f32 %v1171, %v1041
        %v1174 = vmul.f32 %v1172, 1.442695
        %v1175 = vpow.pop %v1174
        %v1176 = vmul.f32 %v1173, 1.442695
        %v1177 = vpow.pop %v1176
        %v1178 = vsel %vm1114, %v1175, 0.0
        %1179 = vadd.xlane.f32.xlu0 %v1178
        %v1180 = vpop.xlane.xlu0 %1179
        %v1181 = vsel %vm1114, %v1177, 0.0
        %1182 = vadd.xlane.f32.xlu0 %v1181
        %v1183 = vpop.xlane.xlu0 %1182
        %v1184 = vrcp.pop %v1180
        %v1185 = vrcp.pop %v1183
        %v1186 = vmul.f32 %v1175, %v1184
        %v1187 = vmul.f32 %v1177, %v1185
        %v1188 = vpack.c.bf16 %v1187, %v1186
        %1189 = vrot.lane.b32.xlu0 %v1081, 56
        %v1190 = vpop.permute.xlu0 %1189
        %v1193 = vsel %vm1114, %v1188, 0
        %1195 = vmatpush.bf16.msra.mxu0 0
        %1196 = vmatpush.bf16.msra.mxu0 0
        %1197 = vmatpush.bf16.msra.mxu0 0
        %1198 = vmatpush.bf16.msra.mxu0 0
        %1199 = vmatpush.bf16.msra.mxu0 0
        %1200 = vmatpush.bf16.msra.mxu0 0
        %1201 = vmatpush.bf16.msra.mxu0 0
        %1202 = vmatpush.bf16.msra.mxu0 %v1190
        %1203 = vmatmul.bf16.gmra.mxu0 %v1193
        %v1204 = vpop.f32.mrf.mxu0
        %v1205 = vadd.f32 0.0, %v1204
        %v1206 = vpop.f32.mrf.mxu0
        %v1207 = vadd.f32 0.0, %v1206
        %1208 = vdwg.mxu0
        %1209 = vrot.lane.b32.xlu0 %v1081, 112
        %v1210 = vpop.permute.xlu0 %1209
        %1211 = vrot.lane.b32.xlu0 %v1081, 80
        %v1212 = vpop.permute.xlu0 %1211
        %v1214 = vsel %vm1085, %v1210, 0
        %v1217 = vsel %vm1085, %v1212, 0
        %1219 = vmatpush.bf16.xpose.msra.mxu0 0
        %1220 = vmatpush.bf16.xpose.msra.mxu0 0
        %1221 = vmatpush.bf16.xpose.msra.mxu0 0
        %1222 = vmatpush.bf16.xpose.msra.mxu0 0
        %1223 = vmatpush.bf16.xpose.msra.mxu0 0
        %1224 = vmatpush.bf16.xpose.msra.mxu0 0
        %1225 = vmatpush.bf16.xpose.msra.mxu0 0
        %1226 = vmatpush.bf16.xpose.msra.mxu0 %v1217
        %1227 = vmatmul.bf16.gmra.mxu0 %v1214
        %v1228 = vpop.f32.mrf.mxu0
        %v1229 = vadd.f32 0.0, %v1228
        %v1230 = vpop.f32.mrf.mxu0
        %v1231 = vadd.f32 0.0, %v1230
        %1232 = vdwg.mxu0
        %v1233 = vmul.f32 %v1229, 0.35355338
        %v1234 = vmul.f32 %v1231, 0.35355338
        %v1235 = vadd.f32 %v1233, %v1040
        %v1236 = vadd.f32 %v1234, %v1041
        %v1237 = vmul.f32 %v1235, 1.442695
        %v1238 = vpow.pop %v1237
        %v1239 = vmul.f32 %v1236, 1.442695
        %v1240 = vpow.pop %v1239
        %v1241 = vsel %vm1114, %v1238, 0.0
        %1242 = vadd.xlane.f32.xlu0 %v1241
        %v1243 = vpop.xlane.xlu0 %1242
        %v1244 = vsel %vm1114, %v1240, 0.0
        %1245 = vadd.xlane.f32.xlu0 %v1244
        %v1246 = vpop.xlane.xlu0 %1245
        %v1247 = vrcp.pop %v1243
        %v1248 = vrcp.pop %v1246
        %v1249 = vmul.f32 %v1238, %v1247
        %v1250 = vmul.f32 %v1240, %v1248
        %v1251 = vpack.c.bf16 %v1250, %v1249
        %1252 = vrot.lane.b32.xlu0 %v1081, 48
        %v1253 = vpop.permute.xlu0 %1252
        %v1256 = vsel %vm1114, %v1251, 0
        %1258 = vmatpush.bf16.msra.mxu0 0
        %1259 = vmatpush.bf16.msra.mxu0 0
        %1260 = vmatpush.bf16.msra.mxu0 0
        %1261 = vmatpush.bf16.msra.mxu0 0
        %1262 = vmatpush.bf16.msra.mxu0 0
        %1263 = vmatpush.bf16.msra.mxu0 0
        %1264 = vmatpush.bf16.msra.mxu0 0
        %1265 = vmatpush.bf16.msra.mxu0 %v1253
        %1266 = vmatmul.bf16.gmra.mxu0 %v1256
        %v1267 = vpop.f32.mrf.mxu0
        %v1268 = vadd.f32 0.0, %v1267
        %v1269 = vpop.f32.mrf.mxu0
        %v1270 = vadd.f32 0.0, %v1269
        %1271 = vdwg.mxu0
        %1272 = vrot.lane.b32.xlu0 %v1081, 104
        %v1273 = vpop.permute.xlu0 %1272
        %1274 = vrot.lane.b32.xlu0 %v1081, 72
        %v1275 = vpop.permute.xlu0 %1274
        %v1277 = vsel %vm1085, %v1273, 0
        %v1280 = vsel %vm1085, %v1275, 0
        %1282 = vmatpush.bf16.xpose.msra.mxu0 0
        %1283 = vmatpush.bf16.xpose.msra.mxu0 0
        %1284 = vmatpush.bf16.xpose.msra.mxu0 0
        %1285 = vmatpush.bf16.xpose.msra.mxu0 0
        %1286 = vmatpush.bf16.xpose.msra.mxu0 0
        %1287 = vmatpush.bf16.xpose.msra.mxu0 0
        %1288 = vmatpush.bf16.xpose.msra.mxu0 0
        %1289 = vmatpush.bf16.xpose.msra.mxu0 %v1280
        %1290 = vmatmul.bf16.gmra.mxu0 %v1277
        %v1291 = vpop.f32.mrf.mxu0
        %v1292 = vadd.f32 0.0, %v1291
        %v1293 = vpop.f32.mrf.mxu0
        %v1294 = vadd.f32 0.0, %v1293
        %1295 = vdwg.mxu0
        %v1296 = vmul.f32 %v1292, 0.35355338
        %v1297 = vmul.f32 %v1294, 0.35355338
        %v1298 = vadd.f32 %v1296, %v1040
        %v1299 = vadd.f32 %v1297, %v1041
        %v1300 = vmul.f32 %v1298, 1.442695
        %v1301 = vpow.pop %v1300
        %v1302 = vmul.f32 %v1299, 1.442695
        %v1303 = vpow.pop %v1302
        %v1304 = vsel %vm1114, %v1301, 0.0
        %1305 = vadd.xlane.f32.xlu0 %v1304
        %v1306 = vpop.xlane.xlu0 %1305
        %v1307 = vsel %vm1114, %v1303, 0.0
        %1308 = vadd.xlane.f32.xlu0 %v1307
        %v1309 = vpop.xlane.xlu0 %1308
        %v1310 = vrcp.pop %v1306
        %v1311 = vrcp.pop %v1309
        %v1312 = vmul.f32 %v1301, %v1310
        %v1313 = vmul.f32 %v1303, %v1311
        %v1314 = vpack.c.bf16 %v1313, %v1312
        %1315 = vrot.lane.b32.xlu0 %v1081, 40
        %v1316 = vpop.permute.xlu0 %1315
        %v1319 = vsel %vm1114, %v1314, 0
        %1321 = vmatpush.bf16.msra.mxu0 0
        %1322 = vmatpush.bf16.msra.mxu0 0
        %1323 = vmatpush.bf16.msra.mxu0 0
        %1324 = vmatpush.bf16.msra.mxu0 0
        %1325 = vmatpush.bf16.msra.mxu0 0
        %1326 = vmatpush.bf16.msra.mxu0 0
        %1327 = vmatpush.bf16.msra.mxu0 0
        %1328 = vmatpush.bf16.msra.mxu0 %v1316
        %1329 = vmatmul.bf16.gmra.mxu0 %v1319
        %v1330 = vpop.f32.mrf.mxu0
        %v1331 = vadd.f32 0.0, %v1330
        %v1332 = vpop.f32.mrf.mxu0
        %v1333 = vadd.f32 0.0, %v1332
        %1334 = vdwg.mxu0
        %1337 = vrot.lane.b32.xlu0 %v1205, 8
        %v1338 = vpop.permute.xlu0 %1337
        %1339 = vrot.lane.b32.xlu0 %v1207, 8
        %v1340 = vpop.permute.xlu0 %1339
        %1345 = vrot.lane.b32.xlu0 %v1268, 16
        %v1346 = vpop.permute.xlu0 %1345
        %1347 = vrot.lane.b32.xlu0 %v1270, 16
        %v1348 = vpop.permute.xlu0 %1347
        %1353 = vrot.lane.b32.xlu0 %v1331, 24
        %v1354 = vpop.permute.xlu0 %1353
        %1355 = vrot.lane.b32.xlu0 %v1333, 24
        %v1356 = vpop.permute.xlu0 %1355
        %v1359 = vsel %vm1085, %v1142, %v1338
        %v1360 = vsel %vm1085, %v1144, %v1340
        %v1361 = vsel %vm1114, %v1359, %v1346
        %v1362 = vsel %vm1114, %v1360, %v1348
        %vm1363 = vcmask 195584
        %v1364 = vsel %vm1363, %v1361, %v1354
        %v1365 = vsel %vm1363, %v1362, %v1356
        %v1366 = vpack.c.bf16 %v1365, %v1364
        %v1367 = vld [vmem:[%s837] sm:$0xf]
        %v1368 = vld [vmem:[%s837 + $0x4] sm:$0xf]
        %v1369 = vld [vmem:[%s837 + $0x8] sm:$0xf]
        %v1370 = vld [vmem:[%s837 + $0xc] sm:$0xf]
        %v1371 = vld [vmem:[%s840] sm:$0x1]
        %v1373 = vperm.slane %v1371, 0
        %v1379 = vunpack.c.l.b16 %v1367
        %v1380 = vunpack.c.l.b16 %v1368
        %v1381 = vunpack.c.l.b16 %v1369
        %v1382 = vunpack.c.l.b16 %v1370
        %v1383 = vpack.c.b16 %v1380, %v1379
        %v1384 = vpack.c.b16 %v1382, %v1381
        %v1388 = vsel %vm1063, %v1366, 0
        %1390 = vmatpush.bf16.msra.mxu0 0
        %1391 = vmatpush.bf16.msra.mxu0 0
        %1392 = vmatpush.bf16.msra.mxu0 0
        %1393 = vmatpush.bf16.msra.mxu0 0
        %1394 = vmatpush.bf16.msra.mxu0 0
        %1395 = vmatpush.bf16.msra.mxu0 0
        %1396 = vmatpush.bf16.msra.mxu0 %v1384
        %1397 = vmatpush.bf16.msra.mxu0 %v1383
        %1398 = vmatmul.bf16.gmra.mxu0 %v1388
        %v1399 = vpop.f32.mrf.mxu0
        %v1400 = vadd.f32 %v1373, %v1399
        %v1401 = vpop.f32.mrf.mxu0
        %v1402 = vadd.f32 %v1373, %v1401
        %1403 = vdwg.mxu0
        %v1404 = vadd.f32 %v1400, %v1038
        %v1405 = vadd.f32 %v1402, %v1039
        %v1406 = vld [vmem:[%s843] sm:$0x1]
        %v1407 = vld [vmem:[%s846] sm:$0x1]
        %v1408 = vsel %vm1063, %v1404, 0.0
        %1409 = vadd.xlane.f32.xlu0 %v1408
        %v1410 = vpop.xlane.xlu0 %1409
        %v1411 = vsel %vm1063, %v1405, 0.0
        %1412 = vadd.xlane.f32.xlu0 %v1411
        %v1413 = vpop.xlane.xlu0 %1412
        %v1414 = vrcp.pop 32.0
        %v1415 = vmul.f32 32.0, %v1414
        %v1416 = vsub.f32 1.0, %v1415
        %v1417 = vmul.f32 %v1414, %v1416
        %v1418 = vadd.f32 %v1414, %v1417
        %vm1419 = vweird.f32 %v1414
        %v1420 = vsel %vm1419, %v1414, %v1418
        %v1421 = vmul.f32 %v1410, %v1420
        %v1422 = vmul.f32 %v1413, %v1420
        %v1423 = vsub.f32 %v1404, %v1421
        %v1424 = vsub.f32 %v1405, %v1422
        %v1425 = vmul.f32 %v1423, %v1423
        %v1426 = vmul.f32 %v1424, %v1424
        %v1427 = vsel %vm1063, %v1425, 0.0
        %1428 = vadd.xlane.f32.xlu0 %v1427
        %v1429 = vpop.xlane.xlu0 %1428
        %v1430 = vsel %vm1063, %v1426, 0.0
        %1431 = vadd.xlane.f32.xlu0 %v1430
        %v1432 = vpop.xlane.xlu0 %1431
        %v1433 = vmul.f32 %v1429, %v1420
        %v1434 = vmul.f32 %v1432, %v1420
        %v1435 = vadd.f32 %v1433, 1e-12
        %v1436 = vadd.f32 %v1434, 1e-12
        %v1437 = vrsqrt.pop %v1435
        %v1438 = vmul.f32 %v1437, %v1435
        %v1439 = vmul.f32 %v1438, %v1437
        %v1440 = vmul.f32 0.5, %v1439
        %v1441 = vsub.f32 1.5, %v1440
        %v1442 = vmul.f32 %v1437, %v1441
        %vm1443 = vweird.f32 %v1435
        %vm1444 = vweird.f32 %v1437
        %vm1445 = vmor %vm1443, %vm1444
        %v1446 = vsel %vm1445, %v1437, %v1442
        %v1447 = vrsqrt.pop %v1436
        %v1448 = vmul.f32 %v1447, %v1436
        %v1449 = vmul.f32 %v1448, %v1447
        %v1450 = vmul.f32 0.5, %v1449
        %v1451 = vsub.f32 1.5, %v1450
        %v1452 = vmul.f32 %v1447, %v1451
        %vm1453 = vweird.f32 %v1436
        %vm1454 = vweird.f32 %v1447
        %vm1455 = vmor %vm1453, %vm1454
        %v1456 = vsel %vm1455, %v1447, %v1452
        %v1457 = vmul.f32 %v1423, %v1446
        %v1458 = vmul.f32 %v1424, %v1456
        %v1460 = vperm.slane %v1406, 0
        %v1462 = vmul.f32 %v1457, %v1460
        %v1463 = vmul.f32 %v1458, %v1460
        %v1465 = vperm.slane %v1407, 0
        %v1467 = vadd.f32 %v1462, %v1465
        %v1468 = vadd.f32 %v1463, %v1465
        %v1469 = vpack.c.bf16 %v1468, %v1467
        %v1470 = vld [vmem:[%s851] sm:$0xf]
        %v1471 = vld [vmem:[%s851 + $0x4] sm:$0xf]
        %v1472 = vld [vmem:[%s851 + $0x8] sm:$0xf]
        %v1473 = vld [vmem:[%s851 + $0xc] sm:$0xf]
        %v1474 = vld [vmem:[%s854] sm:$0x1]
        %v1476 = vperm.slane %v1474, 0
        %v1482 = vunpack.c.l.b16 %v1470
        %v1483 = vunpack.c.l.b16 %v1471
        %v1484 = vunpack.c.l.b16 %v1472
        %v1485 = vunpack.c.l.b16 %v1473
        %v1486 = vpack.c.b16 %v1483, %v1482
        %v1487 = vpack.c.b16 %v1485, %v1484
        %v1491 = vsel %vm1063, %v1469, 0
        %1493 = vmatpush.bf16.msra.mxu0 0
        %1494 = vmatpush.bf16.msra.mxu0 0
        %1495 = vmatpush.bf16.msra.mxu0 0
        %1496 = vmatpush.bf16.msra.mxu0 0
        %1497 = vmatpush.bf16.msra.mxu0 0
        %1498 = vmatpush.bf16.msra.mxu0 0
        %1499 = vmatpush.bf16.msra.mxu0 %v1487
        %1500 = vmatpush.bf16.msra.mxu0 %v1486
        %1501 = vmatmul.bf16.gmra.mxu0 %v1491
        %v1502 = vpop.f32.mrf.mxu0
        %v1503 = vadd.f32 %v1476, %v1502
        %v1504 = vpop.f32.mrf.mxu0
        %v1505 = vadd.f32 %v1476, %v1504
        %1506 = vdwg.mxu0
        %v1507 = vmul.f32 %v1503, 0.5
        %v1508 = vmul.f32 %v1505, 0.5
        %v1509 = vmul.f32 %v1503, 0.044715
        %v1510 = vmul.f32 %v1505, 0.044715
        %v1511 = vmul.f32 %v1509, %v1503
        %v1512 = vmul.f32 %v1510, %v1505
        %v1513 = vmul.f32 %v1511, %v1503
        %v1514 = vmul.f32 %v1512, %v1505
        %v1515 = vadd.f32 %v1503, %v1513
        %v1516 = vadd.f32 %v1505, %v1514
        %v1517 = vmul.f32 %v1515, 0.7978846
        %v1518 = vmul.f32 %v1516, 0.7978846
        %v1519 = vtanh.pop %v1517
        %v1520 = vtanh.pop %v1518
        %v1521 = vadd.f32 %v1519, 1.0
        %v1522 = vadd.f32 %v1520, 1.0
        %v1523 = vmul.f32 %v1507, %v1521
        %v1524 = vmul.f32 %v1508, %v1522
        %v1525 = vpack.c.bf16 %v1524, %v1523
        %v1526 = vld [vmem:[%s859] sm:$0xf]
        %v1527 = vld [vmem:[%s859 + $0x4] sm:$0xf]
        %v1528 = vld [vmem:[%s859 + $0x8] sm:$0xf]
        %v1529 = vld [vmem:[%s859 + $0xc] sm:$0xf]
        %v1530 = vld [vmem:[%s859 + $0x10] sm:$0xf]
        %v1531 = vld [vmem:[%s859 + $0x14] sm:$0xf]
        %v1532 = vld [vmem:[%s859 + $0x18] sm:$0xf]
        %v1533 = vld [vmem:[%s859 + $0x1c] sm:$0xf]
        %v1534 = vld [vmem:[%s862] sm:$0x1]
        %v1536 = vperm.slane %v1534, 0
        %v1546 = vunpack.c.l.b16 %v1526
        %v1547 = vunpack.c.l.b16 %v1527
        %v1548 = vunpack.c.l.b16 %v1528
        %v1549 = vunpack.c.l.b16 %v1529
        %v1550 = vunpack.c.l.b16 %v1530
        %v1551 = vunpack.c.l.b16 %v1531
        %v1552 = vunpack.c.l.b16 %v1532
        %v1553 = vunpack.c.l.b16 %v1533
        %v1554 = vpack.c.b16 %v1547, %v1546
        %v1555 = vpack.c.b16 %v1549, %v1548
        %v1556 = vpack.c.b16 %v1551, %v1550
        %v1557 = vpack.c.b16 %v1553, %v1552
        %vm1562 = vcmask 523264
        %v1564 = vsel %vm1562, %v1525, 0
        %1566 = vmatpush.bf16.msra.mxu0 0
        %1567 = vmatpush.bf16.msra.mxu0 0
        %1568 = vmatpush.bf16.msra.mxu0 0
        %1569 = vmatpush.bf16.msra.mxu0 0
        %1570 = vmatpush.bf16.msra.mxu0 %v1557
        %1571 = vmatpush.bf16.msra.mxu0 %v1556
        %1572 = vmatpush.bf16.msra.mxu0 %v1555
        %1573 = vmatpush.bf16.msra.mxu0 %v1554
        %1574 = vmatmul.bf16.gmra.mxu0 %v1564
        %v1575 = vpop.f32.mrf.mxu0
        %v1576 = vadd.f32 %v1536, %v1575
        %v1577 = vpop.f32.mrf.mxu0
        %v1578 = vadd.f32 %v1536, %v1577
        %1579 = vdwg.mxu0
        %v1580 = vadd.f32 %v1576, %v1467
        %v1581 = vadd.f32 %v1578, %v1468
        %v1582 = vld [vmem:[%s865] sm:$0x1]
        %v1583 = vld [vmem:[%s868] sm:$0x1]
        %v1584 = vsel %vm1063, %v1580, 0.0
        %1585 = vadd.xlane.f32.xlu0 %v1584
        %v1586 = vpop.xlane.xlu0 %1585
        %v1587 = vsel %vm1063, %v1581, 0.0
        %1588 = vadd.xlane.f32.xlu0 %v1587
        %v1589 = vpop.xlane.xlu0 %1588
        %v1590 = vmul.f32 %v1586, %v1420
        %v1591 = vmul.f32 %v1589, %v1420
        %v1592 = vsub.f32 %v1580, %v1590
        %v1593 = vsub.f32 %v1581, %v1591
        %v1594 = vmul.f32 %v1592, %v1592
        %v1595 = vmul.f32 %v1593, %v1593
        %v1596 = vsel %vm1063, %v1594, 0.0
        %1597 = vadd.xlane.f32.xlu0 %v1596
        %v1598 = vpop.xlane.xlu0 %1597
        %v1599 = vsel %vm1063, %v1595, 0.0
        %1600 = vadd.xlane.f32.xlu0 %v1599
        %v1601 = vpop.xlane.xlu0 %1600
        %v1602 = vmul.f32 %v1598, %v1420
        %v1603 = vmul.f32 %v1601, %v1420
        %v1604 = vadd.f32 %v1602, 1e-12
        %v1605 = vadd.f32 %v1603, 1e-12
        %v1606 = vrsqrt.pop %v1604
        %v1607 = vmul.f32 %v1606, %v1604
        %v1608 = vmul.f32 %v1607, %v1606
        %v1609 = vmul.f32 0.5, %v1608
        %v1610 = vsub.f32 1.5, %v1609
        %v1611 = vmul.f32 %v1606, %v1610
        %vm1612 = vweird.f32 %v1604
        %vm1613 = vweird.f32 %v1606
        %vm1614 = vmor %vm1612, %vm1613
        %v1615 = vsel %vm1614, %v1606, %v1611
        %v1616 = vrsqrt.pop %v1605
        %v1617 = vmul.f32 %v1616, %v1605
        %v1618 = vmul.f32 %v1617, %v1616
        %v1619 = vmul.f32 0.5, %v1618
        %v1620 = vsub.f32 1.5, %v1619
        %v1621 = vmul.f32 %v1616, %v1620
        %vm1622 = vweird.f32 %v1605
        %vm1623 = vweird.f32 %v1616
        %vm1624 = vmor %vm1622, %vm1623
        %v1625 = vsel %vm1624, %v1616, %v1621
        %v1626 = vmul.f32 %v1592, %v1615
        %v1627 = vmul.f32 %v1593, %v1625
        %v1629 = vperm.slane %v1582, 0
        %v1631 = vmul.f32 %v1626, %v1629
        %v1632 = vmul.f32 %v1627, %v1629
        %v1634 = vperm.slane %v1583, 0
        %v1636 = vadd.f32 %v1631, %v1634
        %v1637 = vadd.f32 %v1632, %v1634
        %1638 = vst.msk [vmem:[#allocation2] sm:$0xff] %vm1063, %v1636
        %1639 = vst.msk [vmem:[#allocation2 + $0x8] sm:$0xff] %vm1063, %v1637
        %p1640 = scmp.eq.s32.totalorder %s35, 1
        // Predicated region
        $region117: #{custom_bert_forward.1} parent=111 // pred_check
          %p1641 = pneg %p1640
        $region118: #{custom_bert_forward.1} parent=111 // pred_check_branch
          %1643 = sbr.rel (%p1641) target = $region120
        $region119: #{custom_bert_forward.1} parent=111 // pred_region
          %v1645 = vrot.slane %v1637, 7
          %vm1647 = vcmask 1040384
          %v1648 = vsel %vm1647, %v1636, %v1645
          %v1649 = vpack.c.bf16 %v1648, %v1648
          %v1650 = vld [vmem:[%s19] sm:$0xf]
          %v1651 = vld [vmem:[%s19 + $0x4] sm:$0xf]
          %v1652 = vld [vmem:[%s19 + $0x8] sm:$0xf]
          %v1653 = vld [vmem:[%s19 + $0xc] sm:$0xf]
          %v1654 = vld [vmem:[%s20] sm:$0x1]
          %v1656 = vperm.slane %v1654, 0
          %v1662 = vunpack.c.l.b16 %v1650
          %v1663 = vunpack.c.l.b16 %v1651
          %v1664 = vunpack.c.l.b16 %v1652
          %v1665 = vunpack.c.l.b16 %v1653
          %v1666 = vpack.c.b16 %v1663, %v1662
          %v1667 = vpack.c.b16 %v1665, %v1664
          %v1671 = vsel %vm1063, %v1649, 0
          %1673 = vmatpush.bf16.msra.mxu0 0
          %1674 = vmatpush.bf16.msra.mxu0 0
          %1675 = vmatpush.bf16.msra.mxu0 0
          %1676 = vmatpush.bf16.msra.mxu0 0
          %1677 = vmatpush.bf16.msra.mxu0 0
          %1678 = vmatpush.bf16.msra.mxu0 0
          %1679 = vmatpush.bf16.msra.mxu0 %v1667
          %1680 = vmatpush.bf16.msra.mxu0 %v1666
          %1681 = vmatmul.bf16.gmra.mxu0 %v1671
          %v1682 = vpop.f32.mrf.mxu0
          %v1683 = vadd.f32 %v1656, %v1682
          %v1684 = vpop.f32.mrf.mxu0
          %1685 = vdwg.mxu0
          %v1686 = vtanh.pop %v1683
          %v1687 = vpack.c.bf16 %v1686, %v1686
          %v1688 = vld [vmem:[%s21] sm:$0xf]
          %v1689 = vld [vmem:[%s21 + $0x4] sm:$0xf]
          %v1690 = vld [vmem:[%s21 + $0x8] sm:$0xf]
          %v1691 = vld [vmem:[%s21 + $0xc] sm:$0xf]
          %v1692 = vld [vmem:[%s22] sm:$0x1]
          %v1694 = vperm.slane %v1692, 0
          %v1700 = vunpack.c.l.b16 %v1688
          %v1701 = vunpack.c.l.b16 %v1689
          %v1702 = vunpack.c.l.b16 %v1690
          %v1703 = vunpack.c.l.b16 %v1691
          %v1704 = vpack.c.b16 %v1701, %v1700
          %v1705 = vpack.c.b16 %v1703, %v1702
          %v1709 = vsel %vm1063, %v1687, 0
          %1711 = vmatpush.bf16.msra.mxu0 0
          %1712 = vmatpush.bf16.msra.mxu0 0
          %1713 = vmatpush.bf16.msra.mxu0 0
          %1714 = vmatpush.bf16.msra.mxu0 0
          %1715 = vmatpush.bf16.msra.mxu0 0
          %1716 = vmatpush.bf16.msra.mxu0 0
          %1717 = vmatpush.bf16.msra.mxu0 %v1705
          %1718 = vmatpush.bf16.msra.mxu0 %v1704
          %1719 = vmatmul.bf16.gmra.mxu0 %v1709
          %v1720 = vpop.f32.mrf.mxu0
          %v1721 = vadd.f32 %v1694, %v1720
          %v1722 = vpop.f32.mrf.mxu0
          %1723 = vdwg.mxu0
          %vm1724 = vcmask 50176
          %1725 = vst.msk [vmem:[#allocation3] sm:$0x3] %vm1724, %v1721
        $region120: #{custom_bert_forward.1} parent=111 // pred_fallthru
          _
        // Predicated region
        $region121: #{custom_bert_forward.1} parent=111 // pred_check
          %p1726 = pneg %p591
        $region122: #{custom_bert_forward.1} parent=111 // pred_check_branch
          %1728 = sbr.rel (%p1726) target = $region124
        $region123: #{custom_bert_forward.1} parent=111 // pred_region
          %1730 = vsyncadd [#allocation4], 0
          %s1732 = sshll.u32 [#allocation3], 4
          %s1733 = int_to_ptr.vmem [resolvable:$true] %s1732
          %s1734 = sshll.u32 %s23, 4
          %s1735 = int_to_ptr.hbm [resolvable:$true] %s1734
          %1737 = dma.vmem_to_hbm [thread:$0]  %s1733, 32, %s1735, [#allocation4]
        $region124: #{custom_bert_forward.1} parent=111 // pred_fallthru
          _
        // Predicated region
        $region125: #{custom_bert_forward.1} parent=111 // pred_check
          %p1738 = pneg %p591
        $region126: #{custom_bert_forward.1} parent=111 // pred_check_branch
          %1740 = sbr.rel (%p1738) target = $region128
        $region127: #{custom_bert_forward.1} parent=111 // pred_region
          %1742 = dma.done [#allocation4], 32
        $region128: #{custom_bert_forward.1} parent=111 // pred_fallthru
          _
      $region112: #{custom_bert_forward.1} parent=5 // pred_fallthru
        _
      %p1743 = scmp.le.s32.totalorder 2, %s30
      // Predicated region
      $region129: #{custom_bert_forward.1} parent=5 // pred_check
        %p1744 = pneg %p1743
      $region130: #{custom_bert_forward.1} parent=5 // pred_check_branch
        %1746 = sbr.rel (%p1744) target = $region132
      $region131: #{custom_bert_forward.1} parent=5 // pred_region
        %s1747 = ssub.s32 %s30, 2
      $region132: #{custom_bert_forward.1} parent=5 // pred_fallthru
        _
    $region6: #{custom_bert_forward.1} parent=1 // loop_footer
      %s34 = sadd.s32 1, %s30
    $region7: #{custom_bert_forward.1} parent=1 // loop_footer_branch
      %29 = sbr.rel target = $region3
    $region8: #{custom_bert_forward.1} parent=1 // loop_exit
      _
    %1748 = vsyncpa [#allocation4], 1
    %s1749 = scalar_lea.sflag [#allocation4], 1
    %1750 = vsyncpa %s1749, 1

</llo_original>
